<compile_context>
chip_gen: v7x
topology: tpu7x:2x2x1
jax: 0.10.0
libtpu: 0.0.40
codegen_flags: <defaults>
</compile_context>

<pallas_src>
import jax
import jax.numpy as jnp
from jax.experimental import pallas as pl
from jax.experimental.pallas import tpu as pltpu

IN_FEATURES = 4096
HEAD_DIMS = (3, 8, 4, 10, 2)          # pos, TW, rot, ss, arm
N_TOTAL = sum(HEAD_DIMS)              # 27
N_PAD = 128                           # lane-aligned fused output width
MAX_TM = 512                          # batch tile cap (f32 x tile = 8 MiB)


def _fused_heads_kernel(x_ref, w_ref, b_ref, o_ref):
    # x_ref: (TM, 4096) f32 | w_ref: (4096, 128) bf16 (resident) |
    # b_ref: (1, 128) f32   | o_ref: (TM, 128) f32
    x_bf = x_ref[...].astype(jnp.bfloat16)            # in-kernel cast (no extra HBM pass)
    y = jnp.dot(x_bf, w_ref[...], preferred_element_type=jnp.float32)
    y = y + b_ref[...]                                 # bias broadcast over rows (f32)
    o_ref[...] = jnp.maximum(y, 0.0)                   # ReLU; softmax(dim=0) hoisted


def _pick_batch_tile(B):
    """Balanced, sublane-aligned batch tile; even tile count so both v7x TCs work."""
    if B < 16:
        return B                                       # single tile: block == full dim
    n_tiles = max(2, 2 * pl.cdiv(B, 2 * MAX_TM))       # even number of tiles
    tm = pl.cdiv(B, n_tiles)
    tm = ((tm + 7) // 8) * 8                           # round up to sublane multiple
    return min(tm, MAX_TM)


def classification_forward(x, w_pad, b_pad):
    """x: (B, 4096) f32; w_pad: (4096, 128) bf16 (at rest); b_pad: (1, 128) f32.

    Returns (p, tw, r, s, ar) matching the PyTorch module's forward.
    """
    B = x.shape[0]
    tm = _pick_batch_tile(B)
    grid = (pl.cdiv(B, tm),)

    cost = pl.CostEstimate(
        flops=2 * B * IN_FEATURES * N_PAD,
        transcendentals=0,
        bytes_accessed=B * IN_FEATURES * 4            # x (f32)
        + IN_FEATURES * N_PAD * 2                     # W (bf16, resident)
        + N_PAD * 4                                   # bias
        + B * N_PAD * 4,                              # activations out
    )

    act = pl.pallas_call(
        _fused_heads_kernel,
        out_shape=jax.ShapeDtypeStruct((B, N_PAD), jnp.float32),
        grid_spec=pltpu.PrefetchScalarGridSpec(
            num_scalar_prefetch=0,
            grid=grid,
            in_specs=[
                # x: one batch tile per grid step (double-buffered by Pallas).
                pl.BlockSpec((tm, IN_FEATURES), lambda i: (i, 0)),
                # W and bias: same block every step -> stay resident in VMEM.
                pl.BlockSpec((IN_FEATURES, N_PAD), lambda i: (0, 0)),
                pl.BlockSpec((1, N_PAD), lambda i: (0, 0)),
            ],
            out_specs=pl.BlockSpec((tm, N_PAD), lambda i: (i, 0)),
        ),
        compiler_params=pltpu.CompilerParams(
            dimension_semantics=("parallel",),         # batch tiles are independent
            vmem_limit_bytes=40 << 20,                 # f32 x tiles need > v5e's 16 MiB default
        ),
        cost_estimate=cost,
    )(x, w_pad, b_pad)

    # Softmax over dim=0 (per column, across the WHOLE batch) — tiny (B, 27)
    # slab, essentially free in XLA; then split back into the five heads.
    logits = act[:, :N_TOTAL]
    probs = jax.nn.softmax(logits, axis=0)
    outs = []
    off = 0
    for d in HEAD_DIMS:
        outs.append(probs[:, off:off + d])
        off += d
    p, tw, r, s, ar = outs
    return p, tw, r, s, ar


classification_forward_jit = jax.jit(classification_forward)


def init_params(key):
    """Deterministic init mimicking nn.Linear default (uniform +/- 1/sqrt(fan_in)).

    Returns the fused, padded weight in bf16 'at rest' (cast done ONCE here, not
    per call) plus f32 copies for the reference check.
    """
    bound = 1.0 / jnp.sqrt(jnp.float32(IN_FEATURES))
    ws, bs = [], []
    for i, d in enumerate(HEAD_DIMS):
        kw, kb = jax.random.split(jax.random.fold_in(key, i))
        w = jax.random.uniform(kw, (IN_FEATURES, d), jnp.float32, -bound, bound)
        b = jax.random.uniform(kb, (d,), jnp.float32, -bound, bound)
        ws.append(w)
        bs.append(b)
    w_cat = jnp.concatenate(ws, axis=1)                 # (4096, 27) f32
    b_cat = jnp.concatenate(bs, axis=0)                 # (27,) f32
    w_pad = jnp.zeros((IN_FEATURES, N_PAD), jnp.float32).at[:, :N_TOTAL].set(w_cat)
    b_pad = jnp.zeros((1, N_PAD), jnp.float32).at[0, :N_TOTAL].set(b_cat)
    w_pad = w_pad.astype(jnp.bfloat16)                  # bf16 at rest
    return w_pad, b_pad, w_cat, b_cat


def reference_forward(x, w_cat, b_cat, cast_bf16):
    """Pure-JAX reference for the PyTorch forward (optionally on bf16 matmul inputs)."""
    xm = x.astype(jnp.bfloat16) if cast_bf16 else x
    wm = w_cat.astype(jnp.bfloat16) if cast_bf16 else w_cat
    logits = jnp.dot(xm, wm, preferred_element_type=jnp.float32) + b_cat
    outs = []
    off = 0
    for d in HEAD_DIMS:
        y = jnp.maximum(logits[:, off:off + d], 0.0)
        outs.append(jax.nn.softmax(y, axis=0))          # Softmax(dim=0)
        off += d
    return tuple(outs)


def _check(B, key):
    kx, kp = jax.random.split(key)
    x = jax.random.normal(kx, (B, IN_FEATURES), jnp.float32)
    w_pad, b_pad, w_cat, b_cat = init_params(kp)

    outs = classification_forward_jit(x, w_pad, b_pad)
    outs = jax.block_until_ready(outs)

    # Strict check against a reference that uses the same bf16 matmul inputs.
    refs_bf = reference_forward(x, w_cat, b_cat, cast_bf16=True)
    for o, r in zip(outs, refs_bf):
        assert o.shape == r.shape, (o.shape, r.shape)
        err = float(jnp.max(jnp.abs(o - r)))
        assert err < 1e-4, err

    # Loose check against the full-precision (f32) PyTorch-equivalent reference.
    refs_f32 = reference_forward(x, w_cat, b_cat, cast_bf16=False)
    for o, r in zip(outs, refs_f32):
        err = float(jnp.max(jnp.abs(o - r)))
        assert err < 2e-2, err


if __name__ == "__main__":
    key = jax.random.PRNGKey(0)
    # Small-batch case from the original test (single tile, block == full array).
    _check(B=2, key=key)
    # Tiled case: exercises the balanced two-tile split (320+320 for B=640, both
    # v7x TensorCores busy), the resident weight, and the hoisted softmax(dim=0).
    _check(B=640, key=jax.random.fold_in(key, 1))
    print("KERNEL_OK")
</pallas_src>

<mosaic_0001>
module attributes {stable_mosaic.version = 11 : i64} {
  func.func @_fused_heads_kernel(%arg0: i32, %arg1: memref<2x4096xf32, #tpu.memory_space<vmem>>, %arg2: memref<4096x128xbf16, #tpu.memory_space<vmem>>, %arg3: memref<1x128xf32, #tpu.memory_space<vmem>>, %arg4: memref<2x128xf32, #tpu.memory_space<vmem>>) attributes {dimension_semantics = [#tpu.dimension_semantics<parallel>], iteration_bounds = array<i64: 1>, scalar_prefetch = 0 : i64, scratch_operands = 0 : i64, tpu.core_type = #tpu.core_type<tc>, window_params = [{transform_indices = @transform_0, window_bounds = array<i64: 2, 4096>}, {pipeline_mode = #tpu.pipeline_mode<synchronous>, transform_indices = @transform_1, window_bounds = array<i64: 4096, 128>}, {pipeline_mode = #tpu.pipeline_mode<synchronous>, transform_indices = @transform_2, window_bounds = array<i64: 1, 128>}, {transform_indices = @transform_3, window_bounds = array<i64: 2, 128>}]} {
    %c0 = arith.constant 0 : index
    %c0_0 = arith.constant 0 : index
    %0 = vector.load %arg1[%c0, %c0_0] : memref<2x4096xf32, #tpu.memory_space<vmem>>, vector<2x4096xf32>
    %1 = arith.truncf %0 : vector<2x4096xf32> to vector<2x4096xbf16>
    %c0_1 = arith.constant 0 : index
    %c0_2 = arith.constant 0 : index
    %2 = vector.load %arg2[%c0_1, %c0_2] : memref<4096x128xbf16, #tpu.memory_space<vmem>>, vector<4096x128xbf16>
    %cst = arith.constant dense<0.000000e+00> : vector<2x128xf32>
    %3 = tpu.matmul %1, %2, %cst {dimension_numbers = #tpu.dot_dimension_numbers<[1], [0], [0], [1], [0, 0, 1, 1], [], []>} : vector<2x4096xbf16>, vector<4096x128xbf16>, vector<2x128xf32> -> vector<2x128xf32>
    %c0_3 = arith.constant 0 : index
    %c0_4 = arith.constant 0 : index
    %4 = vector.load %arg3[%c0_3, %c0_4] : memref<1x128xf32, #tpu.memory_space<vmem>>, vector<1x128xf32>
    %5 = vector.broadcast %4 : vector<1x128xf32> to vector<2x128xf32>
    %6 = arith.addf %3, %5 : vector<2x128xf32>
    %cst_5 = arith.constant 0.000000e+00 : f32
    %7 = vector.broadcast %cst_5 : f32 to vector<2x128xf32>
    %8 = arith.maximumf %6, %7 : vector<2x128xf32>
    %c0_6 = arith.constant 0 : index
    %c0_7 = arith.constant 0 : index
    %9 = vector.load %arg4[%c0_6, %c0_7] : memref<2x128xf32, #tpu.memory_space<vmem>>, vector<2x128xf32>
    tpu.vector_store %arg4[%c0_6, %c0_7], %8 {strides = array<i32>} : memref<2x128xf32, #tpu.memory_space<vmem>>, vector<2x128xf32>,
    return
  }
  func.func @transform_0(%arg0: i32) -> (i32, i32) {
    %c0_i32 = arith.constant 0 : i32
    %c0_i32_0 = arith.constant 0 : i32
    return %arg0, %c0_i32 : i32, i32
  }
  func.func @transform_1(%arg0: i32) -> (i32, i32) {
    %c0_i32 = arith.constant 0 : i32
    %c0_i32_0 = arith.constant 0 : i32
    %c0_i32_1 = arith.constant 0 : i32
    return %c0_i32, %c0_i32_0 : i32, i32
  }
  func.func @transform_2(%arg0: i32) -> (i32, i32) {
    %c0_i32 = arith.constant 0 : i32
    %c0_i32_0 = arith.constant 0 : i32
    %c0_i32_1 = arith.constant 0 : i32
    return %c0_i32, %c0_i32_0 : i32, i32
  }
  func.func @transform_3(%arg0: i32) -> (i32, i32) {
    %c0_i32 = arith.constant 0 : i32
    %c0_i32_0 = arith.constant 0 : i32
    return %arg0, %c0_i32 : i32, i32
  }
}

</mosaic_0001>

<llo_original>
// kernel: classification_forward.1
$region0: #{classification_forward.1}
  #allocation0 [shape = 'u32[]', space=smem, size = 0x4, offset = 0x4, fixed_abs, tag = 'smem constant byte address 0x4 - core index']
  #allocation1 [shape = 'u32[144,128]{1,0:T(1,128)}', space=vmem, size = 0x12000, scoped, tag = 'internal scratch']
  %s0 = inlined_call_operand.hbm [shape: f32[2,4096], index: 0, kind: input, shape index: {}]
  %s1 = inlined_call_operand.hbm [shape: bf16[4096,128], index: 1, kind: input, shape index: {}]
  %s2 = inlined_call_operand.vmem [shape: f32[1,128], index: 2, kind: input, shape index: {}]
  %s3 = inlined_call_operand.vmem [shape: f32[2,128], index: 3, kind: output, shape index: {}]
  %s4 = sld [smem:[#allocation0]]
  $region30: #{classification_forward.1} parent=0
    _
  %s6 = ssub.s32 1, %s4
  %s7 = scalar_select 0, %s6, %s4
  $region1: #{classification_forward.1} parent=0
    #allocation2 [shape = 'u8[32768]{0}', space=vmem, size = 0x8000, scoped, tag = 'input window, operand 0, single buffered']
    #allocation3 [shape = 's32[1]{0}', space=sflag, size = 0x4, scoped, tag = 'scoped memory for classification_forward.1']
    #allocation4 [shape = 'u8[1048576]{0}', space=vmem, size = 0x100000, scoped, tag = 'input window, operand 1, single buffered']
    #allocation5 [shape = 's32[1]{0}', space=sflag, size = 0x4, scoped, tag = 'scoped memory for classification_forward.1']
    %8 = vsyncpa [#allocation3], 0
    %9 = vsyncpa [#allocation5], 0
    // Predicated region
    $region2: #{classification_forward.1} parent=1 // pred_check
      _
    $region3: #{classification_forward.1} parent=1 // pred_check_branch
      %11 = sbr.rel (0) target = $region5
    $region4: #{classification_forward.1} parent=1 // pred_region
      %s13 = ssub.s32 1024, 1024
      %14 = vsyncadd [#allocation3], %s13
      %s16 = sshll.u32 [#allocation2], 4
      %s17 = int_to_ptr.vmem [resolvable:$true] %s16
      %19 = dma.hbm_to_vmem [thread:$0]  %s0, 1024, %s17, [#allocation3]
    $region5: #{classification_forward.1} parent=1 // pred_fallthru
      _
    // Predicated region
    $region6: #{classification_forward.1} parent=1 // pred_check
      _
    $region7: #{classification_forward.1} parent=1 // pred_check_branch
      %21 = sbr.rel (0) target = $region9
    $region8: #{classification_forward.1} parent=1 // pred_region
      %s23 = ssub.s32 32768, 32768
      %24 = vsyncadd [#allocation5], %s23
      %s25 = sshll.u32 [#allocation4], 4
      %s26 = int_to_ptr.vmem [resolvable:$true] %s25
      %31 = dma.hbm_to_vmem [thread:$0]  %s1, 32768, %s26, [#allocation5], 64, 64, 4
    $region9: #{classification_forward.1} parent=1 // pred_fallthru
      _
    // Predicated region
    $region10: #{classification_forward.1} parent=1 // pred_check
      _
    $region11: #{classification_forward.1} parent=1 // pred_check_branch
      %33 = sbr.rel (0) target = $region13
    $region12: #{classification_forward.1} parent=1 // pred_region
      _
    $region13: #{classification_forward.1} parent=1 // pred_fallthru
      _
    // Predicated region
    $region14: #{classification_forward.1} parent=1 // pred_check
      _
    $region15: #{classification_forward.1} parent=1 // pred_check_branch
      %35 = sbr.rel (0) target = $region17
    $region16: #{classification_forward.1} parent=1 // pred_region
      %36 = dma.done [#allocation3], 1024
    $region17: #{classification_forward.1} parent=1 // pred_fallthru
      _
    // Predicated region
    $region18: #{classification_forward.1} parent=1 // pred_check
      _
    $region19: #{classification_forward.1} parent=1 // pred_check_branch
      %38 = sbr.rel (0) target = $region21
    $region20: #{classification_forward.1} parent=1 // pred_region
      %39 = dma.done [#allocation5], 32768
    $region21: #{classification_forward.1} parent=1 // pred_fallthru
      _
    %v41 = vld [vmem:[#allocation2] sm:$0xff]
    %v42 = vld [vmem:[#allocation2 + $0x8] sm:$0xff]
    %v43 = vld [vmem:[#allocation2 + $0x10] sm:$0xff]
    %v44 = vld [vmem:[#allocation2 + $0x18] sm:$0xff]
    %v45 = vld [vmem:[#allocation2 + $0x20] sm:$0xff]
    %v46 = vld [vmem:[#allocation2 + $0x28] sm:$0xff]
    %v47 = vld [vmem:[#allocation2 + $0x30] sm:$0xff]
    %v48 = vld [vmem:[#allocation2 + $0x38] sm:$0xff]
    %v57 = vcombine.high %v41, %v41
    %v59 = vunpack.c.l.s4 1983009808
    %v60 = vunpack.c.0.s8 %v59
    %v61 = vlaneseq
    %v62 = vshrl.u32 %v61, 7
    %v63 = vsub.s32 %v60, %v62
    %v64 = vrot.slane %v41, %v63
    %v66 = vunpack.c.l.s4 1983009808
    %v67 = vunpack.c.0.s8 %v66
    %v68 = vlaneseq
    %v69 = vshrl.u32 %v68, 7
    %v70 = vsub.s32 %v67, %v69
    %v71 = vrot.slane %v57, %v70
    %v72 = vcombine.high %v64, %v64
    %v73 = vcombine.high %v71, %v71
    %v74 = vcombine.high %v42, %v42
    %v76 = vunpack.c.l.s4 1983009808
    %v77 = vunpack.c.0.s8 %v76
    %v78 = vlaneseq
    %v79 = vshrl.u32 %v78, 7
    %v80 = vsub.s32 %v77, %v79
    %v81 = vrot.slane %v42, %v80
    %v83 = vunpack.c.l.s4 1983009808
    %v84 = vunpack.c.0.s8 %v83
    %v85 = vlaneseq
    %v86 = vshrl.u32 %v85, 7
    %v87 = vsub.s32 %v84, %v86
    %v88 = vrot.slane %v74, %v87
    %v89 = vcombine.high %v81, %v81
    %v90 = vcombine.high %v88, %v88
    %v91 = vcombine.high %v43, %v43
    %v93 = vunpack.c.l.s4 1983009808
    %v94 = vunpack.c.0.s8 %v93
    %v95 = vlaneseq
    %v96 = vshrl.u32 %v95, 7
    %v97 = vsub.s32 %v94, %v96
    %v98 = vrot.slane %v43, %v97
    %v100 = vunpack.c.l.s4 1983009808
    %v101 = vunpack.c.0.s8 %v100
    %v102 = vlaneseq
    %v103 = vshrl.u32 %v102, 7
    %v104 = vsub.s32 %v101, %v103
    %v105 = vrot.slane %v91, %v104
    %v106 = vcombine.high %v98, %v98
    %v107 = vcombine.high %v105, %v105
    %v108 = vcombine.high %v44, %v44
    %v110 = vunpack.c.l.s4 1983009808
    %v111 = vunpack.c.0.s8 %v110
    %v112 = vlaneseq
    %v113 = vshrl.u32 %v112, 7
    %v114 = vsub.s32 %v111, %v113
    %v115 = vrot.slane %v44, %v114
    %v117 = vunpack.c.l.s4 1983009808
    %v118 = vunpack.c.0.s8 %v117
    %v119 = vlaneseq
    %v120 = vshrl.u32 %v119, 7
    %v121 = vsub.s32 %v118, %v120
    %v122 = vrot.slane %v108, %v121
    %v123 = vcombine.high %v115, %v115
    %v124 = vcombine.high %v122, %v122
    %v125 = vcombine.high %v45, %v45
    %v127 = vunpack.c.l.s4 1983009808
    %v128 = vunpack.c.0.s8 %v127
    %v129 = vlaneseq
    %v130 = vshrl.u32 %v129, 7
    %v131 = vsub.s32 %v128, %v130
    %v132 = vrot.slane %v45, %v131
    %v134 = vunpack.c.l.s4 1983009808
    %v135 = vunpack.c.0.s8 %v134
    %v136 = vlaneseq
    %v137 = vshrl.u32 %v136, 7
    %v138 = vsub.s32 %v135, %v137
    %v139 = vrot.slane %v125, %v138
    %v140 = vcombine.high %v132, %v132
    %v141 = vcombine.high %v139, %v139
    %v142 = vcombine.high %v46, %v46
    %v144 = vunpack.c.l.s4 1983009808
    %v145 = vunpack.c.0.s8 %v144
    %v146 = vlaneseq
    %v147 = vshrl.u32 %v146, 7
    %v148 = vsub.s32 %v145, %v147
    %v149 = vrot.slane %v46, %v148
    %v151 = vunpack.c.l.s4 1983009808
    %v152 = vunpack.c.0.s8 %v151
    %v153 = vlaneseq
    %v154 = vshrl.u32 %v153, 7
    %v155 = vsub.s32 %v152, %v154
    %v156 = vrot.slane %v142, %v155
    %v157 = vcombine.high %v149, %v149
    %v158 = vcombine.high %v156, %v156
    %v159 = vcombine.high %v47, %v47
    %v161 = vunpack.c.l.s4 1983009808
    %v162 = vunpack.c.0.s8 %v161
    %v163 = vlaneseq
    %v164 = vshrl.u32 %v163, 7
    %v165 = vsub.s32 %v162, %v164
    %v166 = vrot.slane %v47, %v165
    %v168 = vunpack.c.l.s4 1983009808
    %v169 = vunpack.c.0.s8 %v168
    %v170 = vlaneseq
    %v171 = vshrl.u32 %v170, 7
    %v172 = vsub.s32 %v169, %v171
    %v173 = vrot.slane %v159, %v172
    %v174 = vcombine.high %v166, %v166
    %v175 = vcombine.high %v173, %v173
    %v176 = vcombine.high %v48, %v48
    %v178 = vunpack.c.l.s4 1983009808
    %v179 = vunpack.c.0.s8 %v178
    %v180 = vlaneseq
    %v181 = vshrl.u32 %v180, 7
    %v182 = vsub.s32 %v179, %v181
    %v183 = vrot.slane %v48, %v182
    %v185 = vunpack.c.l.s4 1983009808
    %v186 = vunpack.c.0.s8 %v185
    %v187 = vlaneseq
    %v188 = vshrl.u32 %v187, 7
    %v189 = vsub.s32 %v186, %v188
    %v190 = vrot.slane %v176, %v189
    %v191 = vcombine.high %v183, %v183
    %v192 = vcombine.high %v190, %v190
    %v225 = vpack.c.bf16 %v64, %v64
    %v226 = vpack.c.bf16 %v72, %v72
    %v227 = vpack.c.bf16 %v71, %v71
    %v228 = vpack.c.bf16 %v73, %v73
    %v229 = vpack.c.bf16 %v81, %v81
    %v230 = vpack.c.bf16 %v89, %v89
    %v231 = vpack.c.bf16 %v88, %v88
    %v232 = vpack.c.bf16 %v90, %v90
    %v233 = vpack.c.bf16 %v98, %v98
    %v234 = vpack.c.bf16 %v106, %v106
    %v235 = vpack.c.bf16 %v105, %v105
    %v236 = vpack.c.bf16 %v107, %v107
    %v237 = vpack.c.bf16 %v115, %v115
    %v238 = vpack.c.bf16 %v123, %v123
    %v239 = vpack.c.bf16 %v122, %v122
    %v240 = vpack.c.bf16 %v124, %v124
    %v241 = vpack.c.bf16 %v132, %v132
    %v242 = vpack.c.bf16 %v140, %v140
    %v243 = vpack.c.bf16 %v139, %v139
    %v244 = vpack.c.bf16 %v141, %v141
    %v245 = vpack.c.bf16 %v149, %v149
    %v246 = vpack.c.bf16 %v157, %v157
    %v247 = vpack.c.bf16 %v156, %v156
    %v248 = vpack.c.bf16 %v158, %v158
    %v249 = vpack.c.bf16 %v166, %v166
    %v250 = vpack.c.bf16 %v174, %v174
    %v251 = vpack.c.bf16 %v173, %v173
    %v252 = vpack.c.bf16 %v175, %v175
    %v253 = vpack.c.bf16 %v183, %v183
    %v254 = vpack.c.bf16 %v191, %v191
    %v255 = vpack.c.bf16 %v190, %v190
    %v256 = vpack.c.bf16 %v192, %v192
    %v257 = vld [vmem:[#allocation4] sm:$0xf]
    %v258 = vld [vmem:[#allocation4 + $0x4] sm:$0xf]
    %v259 = vld [vmem:[#allocation4 + $0x8] sm:$0xf]
    %v260 = vld [vmem:[#allocation4 + $0xc] sm:$0xf]
    %v261 = vld [vmem:[#allocation4 + $0x10] sm:$0xf]
    %v262 = vld [vmem:[#allocation4 + $0x14] sm:$0xf]
    %v263 = vld [vmem:[#allocation4 + $0x18] sm:$0xf]
    %v264 = vld [vmem:[#allocation4 + $0x1c] sm:$0xf]
    %v265 = vld [vmem:[#allocation4 + $0x20] sm:$0xf]
    %v266 = vld [vmem:[#allocation4 + $0x24] sm:$0xf]
    %v267 = vld [vmem:[#allocation4 + $0x28] sm:$0xf]
    %v268 = vld [vmem:[#allocation4 + $0x2c] sm:$0xf]
    %v269 = vld [vmem:[#allocation4 + $0x30] sm:$0xf]
    %v270 = vld [vmem:[#allocation4 + $0x34] sm:$0xf]
    %v271 = vld [vmem:[#allocation4 + $0x38] sm:$0xf]
    %v272 = vld [vmem:[#allocation4 + $0x3c] sm:$0xf]
    %v273 = vld [vmem:[#allocation4 + $0x40] sm:$0xf]
    %v274 = vld [vmem:[#allocation4 + $0x44] sm:$0xf]
    %v275 = vld [vmem:[#allocation4 + $0x48] sm:$0xf]
    %v276 = vld [vmem:[#allocation4 + $0x4c] sm:$0xf]
    %v277 = vld [vmem:[#allocation4 + $0x50] sm:$0xf]
    %v278 = vld [vmem:[#allocation4 + $0x54] sm:$0xf]
    %v279 = vld [vmem:[#allocation4 + $0x58] sm:$0xf]
    %v280 = vld [vmem:[#allocation4 + $0x5c] sm:$0xf]
    %v281 = vld [vmem:[#allocation4 + $0x60] sm:$0xf]
    %v282 = vld [vmem:[#allocation4 + $0x64] sm:$0xf]
    %v283 = vld [vmem:[#allocation4 + $0x68] sm:$0xf]
    %v284 = vld [vmem:[#allocation4 + $0x6c] sm:$0xf]
    %v285 = vld [vmem:[#allocation4 + $0x70] sm:$0xf]
    %v286 = vld [vmem:[#allocation4 + $0x74] sm:$0xf]
    %v287 = vld [vmem:[#allocation4 + $0x78] sm:$0xf]
    %v288 = vld [vmem:[#allocation4 + $0x7c] sm:$0xf]
    %v289 = vld [vmem:[#allocation4 + $0x80] sm:$0xf]
    %v290 = vld [vmem:[#allocation4 + $0x84] sm:$0xf]
    %v291 = vld [vmem:[#allocation4 + $0x88] sm:$0xf]
    %v292 = vld [vmem:[#allocation4 + $0x8c] sm:$0xf]
    %v293 = vld [vmem:[#allocation4 + $0x90] sm:$0xf]
    %v294 = vld [vmem:[#allocation4 + $0x94] sm:$0xf]
    %v295 = vld [vmem:[#allocation4 + $0x98] sm:$0xf]
    %v296 = vld [vmem:[#allocation4 + $0x9c] sm:$0xf]
    %v297 = vld [vmem:[#allocation4 + $0xa0] sm:$0xf]
    %v298 = vld [vmem:[#allocation4 + $0xa4] sm:$0xf]
    %v299 = vld [vmem:[#allocation4 + $0xa8] sm:$0xf]
    %v300 = vld [vmem:[#allocation4 + $0xac] sm:$0xf]
    %v301 = vld [vmem:[#allocation4 + $0xb0] sm:$0xf]
    %v302 = vld [vmem:[#allocation4 + $0xb4] sm:$0xf]
    %v303 = vld [vmem:[#allocation4 + $0xb8] sm:$0xf]
    %v304 = vld [vmem:[#allocation4 + $0xbc] sm:$0xf]
    %v305 = vld [vmem:[#allocation4 + $0xc0] sm:$0xf]
    %v306 = vld [vmem:[#allocation4 + $0xc4] sm:$0xf]
    %v307 = vld [vmem:[#allocation4 + $0xc8] sm:$0xf]
    %v308 = vld [vmem:[#allocation4 + $0xcc] sm:$0xf]
    %v309 = vld [vmem:[#allocation4 + $0xd0] sm:$0xf]
    %v310 = vld [vmem:[#allocation4 + $0xd4] sm:$0xf]
    %v311 = vld [vmem:[#allocation4 + $0xd8] sm:$0xf]
    %v312 = vld [vmem:[#allocation4 + $0xdc] sm:$0xf]
    %v313 = vld [vmem:[#allocation4 + $0xe0] sm:$0xf]
    %v314 = vld [vmem:[#allocation4 + $0xe4] sm:$0xf]
    %v315 = vld [vmem:[#allocation4 + $0xe8] sm:$0xf]
    %v316 = vld [vmem:[#allocation4 + $0xec] sm:$0xf]
    %v317 = vld [vmem:[#allocation4 + $0xf0] sm:$0xf]
    %v318 = vld [vmem:[#allocation4 + $0xf4] sm:$0xf]
    %v319 = vld [vmem:[#allocation4 + $0xf8] sm:$0xf]
    %v320 = vld [vmem:[#allocation4 + $0xfc] sm:$0xf]
    %v321 = vld [vmem:[#allocation4 + $0x100] sm:$0xf]
    %v322 = vld [vmem:[#allocation4 + $0x104] sm:$0xf]
    %v323 = vld [vmem:[#allocation4 + $0x108] sm:$0xf]
    %v324 = vld [vmem:[#allocation4 + $0x10c] sm:$0xf]
    %v325 = vld [vmem:[#allocation4 + $0x110] sm:$0xf]
    %v326 = vld [vmem:[#allocation4 + $0x114] sm:$0xf]
    %v327 = vld [vmem:[#allocation4 + $0x118] sm:$0xf]
    %v328 = vld [vmem:[#allocation4 + $0x11c] sm:$0xf]
    %v329 = vld [vmem:[#allocation4 + $0x120] sm:$0xf]
    %v330 = vld [vmem:[#allocation4 + $0x124] sm:$0xf]
    %v331 = vld [vmem:[#allocation4 + $0x128] sm:$0xf]
    %v332 = vld [vmem:[#allocation4 + $0x12c] sm:$0xf]
    %v333 = vld [vmem:[#allocation4 + $0x130] sm:$0xf]
    %v334 = vld [vmem:[#allocation4 + $0x134] sm:$0xf]
    %v335 = vld [vmem:[#allocation4 + $0x138] sm:$0xf]
    %v336 = vld [vmem:[#allocation4 + $0x13c] sm:$0xf]
    %v337 = vld [vmem:[#allocation4 + $0x140] sm:$0xf]
    %v338 = vld [vmem:[#allocation4 + $0x144] sm:$0xf]
    %v339 = vld [vmem:[#allocation4 + $0x148] sm:$0xf]
    %v340 = vld [vmem:[#allocation4 + $0x14c] sm:$0xf]
    %v341 = vld [vmem:[#allocation4 + $0x150] sm:$0xf]
    %v342 = vld [vmem:[#allocation4 + $0x154] sm:$0xf]
    %v343 = vld [vmem:[#allocation4 + $0x158] sm:$0xf]
    %v344 = vld [vmem:[#allocation4 + $0x15c] sm:$0xf]
    %v345 = vld [vmem:[#allocation4 + $0x160] sm:$0xf]
    %v346 = vld [vmem:[#allocation4 + $0x164] sm:$0xf]
    %v347 = vld [vmem:[#allocation4 + $0x168] sm:$0xf]
    %v348 = vld [vmem:[#allocation4 + $0x16c] sm:$0xf]
    %v349 = vld [vmem:[#allocation4 + $0x170] sm:$0xf]
    %v350 = vld [vmem:[#allocation4 + $0x174] sm:$0xf]
    %v351 = vld [vmem:[#allocation4 + $0x178] sm:$0xf]
    %v352 = vld [vmem:[#allocation4 + $0x17c] sm:$0xf]
    %v353 = vld [vmem:[#allocation4 + $0x180] sm:$0xf]
    %v354 = vld [vmem:[#allocation4 + $0x184] sm:$0xf]
    %v355 = vld [vmem:[#allocation4 + $0x188] sm:$0xf]
    %v356 = vld [vmem:[#allocation4 + $0x18c] sm:$0xf]
    %v357 = vld [vmem:[#allocation4 + $0x190] sm:$0xf]
    %v358 = vld [vmem:[#allocation4 + $0x194] sm:$0xf]
    %v359 = vld [vmem:[#allocation4 + $0x198] sm:$0xf]
    %v360 = vld [vmem:[#allocation4 + $0x19c] sm:$0xf]
    %v361 = vld [vmem:[#allocation4 + $0x1a0] sm:$0xf]
    %v362 = vld [vmem:[#allocation4 + $0x1a4] sm:$0xf]
    %v363 = vld [vmem:[#allocation4 + $0x1a8] sm:$0xf]
    %v364 = vld [vmem:[#allocation4 + $0x1ac] sm:$0xf]
    %v365 = vld [vmem:[#allocation4 + $0x1b0] sm:$0xf]
    %v366 = vld [vmem:[#allocation4 + $0x1b4] sm:$0xf]
    %v367 = vld [vmem:[#allocation4 + $0x1b8] sm:$0xf]
    %v368 = vld [vmem:[#allocation4 + $0x1bc] sm:$0xf]
    %v369 = vld [vmem:[#allocation4 + $0x1c0] sm:$0xf]
    %v370 = vld [vmem:[#allocation4 + $0x1c4] sm:$0xf]
    %v371 = vld [vmem:[#allocation4 + $0x1c8] sm:$0xf]
    %v372 = vld [vmem:[#allocation4 + $0x1cc] sm:$0xf]
    %v373 = vld [vmem:[#allocation4 + $0x1d0] sm:$0xf]
    %v374 = vld [vmem:[#allocation4 + $0x1d4] sm:$0xf]
    %v375 = vld [vmem:[#allocation4 + $0x1d8] sm:$0xf]
    %v376 = vld [vmem:[#allocation4 + $0x1dc] sm:$0xf]
    %v377 = vld [vmem:[#allocation4 + $0x1e0] sm:$0xf]
    %v378 = vld [vmem:[#allocation4 + $0x1e4] sm:$0xf]
    %v379 = vld [vmem:[#allocation4 + $0x1e8] sm:$0xf]
    %v380 = vld [vmem:[#allocation4 + $0x1ec] sm:$0xf]
    %v381 = vld [vmem:[#allocation4 + $0x1f0] sm:$0xf]
    %v382 = vld [vmem:[#allocation4 + $0x1f4] sm:$0xf]
    %v383 = vld [vmem:[#allocation4 + $0x1f8] sm:$0xf]
    %v384 = vld [vmem:[#allocation4 + $0x1fc] sm:$0xf]
    %v385 = vld [vmem:[#allocation4 + $0x200] sm:$0xf]
    %v386 = vld [vmem:[#allocation4 + $0x204] sm:$0xf]
    %v387 = vld [vmem:[#allocation4 + $0x208] sm:$0xf]
    %v388 = vld [vmem:[#allocation4 + $0x20c] sm:$0xf]
    %v389 = vld [vmem:[#allocation4 + $0x210] sm:$0xf]
    %v390 = vld [vmem:[#allocation4 + $0x214] sm:$0xf]
    %v391 = vld [vmem:[#allocation4 + $0x218] sm:$0xf]
    %v392 = vld [vmem:[#allocation4 + $0x21c] sm:$0xf]
    %v393 = vld [vmem:[#allocation4 + $0x220] sm:$0xf]
    %v394 = vld [vmem:[#allocation4 + $0x224] sm:$0xf]
    %v395 = vld [vmem:[#allocation4 + $0x228] sm:$0xf]
    %v396 = vld [vmem:[#allocation4 + $0x22c] sm:$0xf]
    %v397 = vld [vmem:[#allocation4 + $0x230] sm:$0xf]
    %v398 = vld [vmem:[#allocation4 + $0x234] sm:$0xf]
    %v399 = vld [vmem:[#allocation4 + $0x238] sm:$0xf]
    %v400 = vld [vmem:[#allocation4 + $0x23c] sm:$0xf]
    %v401 = vld [vmem:[#allocation4 + $0x240] sm:$0xf]
    %v402 = vld [vmem:[#allocation4 + $0x244] sm:$0xf]
    %v403 = vld [vmem:[#allocation4 + $0x248] sm:$0xf]
    %v404 = vld [vmem:[#allocation4 + $0x24c] sm:$0xf]
    %v405 = vld [vmem:[#allocation4 + $0x250] sm:$0xf]
    %v406 = vld [vmem:[#allocation4 + $0x254] sm:$0xf]
    %v407 = vld [vmem:[#allocation4 + $0x258] sm:$0xf]
    %v408 = vld [vmem:[#allocation4 + $0x25c] sm:$0xf]
    %v409 = vld [vmem:[#allocation4 + $0x260] sm:$0xf]
    %v410 = vld [vmem:[#allocation4 + $0x264] sm:$0xf]
    %v411 = vld [vmem:[#allocation4 + $0x268] sm:$0xf]
    %v412 = vld [vmem:[#allocation4 + $0x26c] sm:$0xf]
    %v413 = vld [vmem:[#allocation4 + $0x270] sm:$0xf]
    %v414 = vld [vmem:[#allocation4 + $0x274] sm:$0xf]
    %v415 = vld [vmem:[#allocation4 + $0x278] sm:$0xf]
    %v416 = vld [vmem:[#allocation4 + $0x27c] sm:$0xf]
    %v417 = vld [vmem:[#allocation4 + $0x280] sm:$0xf]
    %v418 = vld [vmem:[#allocation4 + $0x284] sm:$0xf]
    %v419 = vld [vmem:[#allocation4 + $0x288] sm:$0xf]
    %v420 = vld [vmem:[#allocation4 + $0x28c] sm:$0xf]
    %v421 = vld [vmem:[#allocation4 + $0x290] sm:$0xf]
    %v422 = vld [vmem:[#allocation4 + $0x294] sm:$0xf]
    %v423 = vld [vmem:[#allocation4 + $0x298] sm:$0xf]
    %v424 = vld [vmem:[#allocation4 + $0x29c] sm:$0xf]
    %v425 = vld [vmem:[#allocation4 + $0x2a0] sm:$0xf]
    %v426 = vld [vmem:[#allocation4 + $0x2a4] sm:$0xf]
    %v427 = vld [vmem:[#allocation4 + $0x2a8] sm:$0xf]
    %v428 = vld [vmem:[#allocation4 + $0x2ac] sm:$0xf]
    %v429 = vld [vmem:[#allocation4 + $0x2b0] sm:$0xf]
    %v430 = vld [vmem:[#allocation4 + $0x2b4] sm:$0xf]
    %v431 = vld [vmem:[#allocation4 + $0x2b8] sm:$0xf]
    %v432 = vld [vmem:[#allocation4 + $0x2bc] sm:$0xf]
    %v433 = vld [vmem:[#allocation4 + $0x2c0] sm:$0xf]
    %v434 = vld [vmem:[#allocation4 + $0x2c4] sm:$0xf]
    %v435 = vld [vmem:[#allocation4 + $0x2c8] sm:$0xf]
    %v436 = vld [vmem:[#allocation4 + $0x2cc] sm:$0xf]
    %v437 = vld [vmem:[#allocation4 + $0x2d0] sm:$0xf]
    %v438 = vld [vmem:[#allocation4 + $0x2d4] sm:$0xf]
    %v439 = vld [vmem:[#allocation4 + $0x2d8] sm:$0xf]
    %v440 = vld [vmem:[#allocation4 + $0x2dc] sm:$0xf]
    %v441 = vld [vmem:[#allocation4 + $0x2e0] sm:$0xf]
    %v442 = vld [vmem:[#allocation4 + $0x2e4] sm:$0xf]
    %v443 = vld [vmem:[#allocation4 + $0x2e8] sm:$0xf]
    %v444 = vld [vmem:[#allocation4 + $0x2ec] sm:$0xf]
    %v445 = vld [vmem:[#allocation4 + $0x2f0] sm:$0xf]
    %v446 = vld [vmem:[#allocation4 + $0x2f4] sm:$0xf]
    %v447 = vld [vmem:[#allocation4 + $0x2f8] sm:$0xf]
    %v448 = vld [vmem:[#allocation4 + $0x2fc] sm:$0xf]
    %v449 = vld [vmem:[#allocation4 + $0x300] sm:$0xf]
    %v450 = vld [vmem:[#allocation4 + $0x304] sm:$0xf]
    %v451 = vld [vmem:[#allocation4 + $0x308] sm:$0xf]
    %v452 = vld [vmem:[#allocation4 + $0x30c] sm:$0xf]
    %v453 = vld [vmem:[#allocation4 + $0x310] sm:$0xf]
    %v454 = vld [vmem:[#allocation4 + $0x314] sm:$0xf]
    %v455 = vld [vmem:[#allocation4 + $0x318] sm:$0xf]
    %v456 = vld [vmem:[#allocation4 + $0x31c] sm:$0xf]
    %v457 = vld [vmem:[#allocation4 + $0x320] sm:$0xf]
    %v458 = vld [vmem:[#allocation4 + $0x324] sm:$0xf]
    %v459 = vld [vmem:[#allocation4 + $0x328] sm:$0xf]
    %v460 = vld [vmem:[#allocation4 + $0x32c] sm:$0xf]
    %v461 = vld [vmem:[#allocation4 + $0x330] sm:$0xf]
    %v462 = vld [vmem:[#allocation4 + $0x334] sm:$0xf]
    %v463 = vld [vmem:[#allocation4 + $0x338] sm:$0xf]
    %v464 = vld [vmem:[#allocation4 + $0x33c] sm:$0xf]
    %v465 = vld [vmem:[#allocation4 + $0x340] sm:$0xf]
    %v466 = vld [vmem:[#allocation4 + $0x344] sm:$0xf]
    %v467 = vld [vmem:[#allocation4 + $0x348] sm:$0xf]
    %v468 = vld [vmem:[#allocation4 + $0x34c] sm:$0xf]
    %v469 = vld [vmem:[#allocation4 + $0x350] sm:$0xf]
    %v470 = vld [vmem:[#allocation4 + $0x354] sm:$0xf]
    %v471 = vld [vmem:[#allocation4 + $0x358] sm:$0xf]
    %v472 = vld [vmem:[#allocation4 + $0x35c] sm:$0xf]
    %v473 = vld [vmem:[#allocation4 + $0x360] sm:$0xf]
    %v474 = vld [vmem:[#allocation4 + $0x364] sm:$0xf]
    %v475 = vld [vmem:[#allocation4 + $0x368] sm:$0xf]
    %v476 = vld [vmem:[#allocation4 + $0x36c] sm:$0xf]
    %v477 = vld [vmem:[#allocation4 + $0x370] sm:$0xf]
    %v478 = vld [vmem:[#allocation4 + $0x374] sm:$0xf]
    %v479 = vld [vmem:[#allocation4 + $0x378] sm:$0xf]
    %v480 = vld [vmem:[#allocation4 + $0x37c] sm:$0xf]
    %v481 = vld [vmem:[#allocation4 + $0x380] sm:$0xf]
    %v482 = vld [vmem:[#allocation4 + $0x384] sm:$0xf]
    %v483 = vld [vmem:[#allocation4 + $0x388] sm:$0xf]
    %v484 = vld [vmem:[#allocation4 + $0x38c] sm:$0xf]
    %v485 = vld [vmem:[#allocation4 + $0x390] sm:$0xf]
    %v486 = vld [vmem:[#allocation4 + $0x394] sm:$0xf]
    %v487 = vld [vmem:[#allocation4 + $0x398] sm:$0xf]
    %v488 = vld [vmem:[#allocation4 + $0x39c] sm:$0xf]
    %v489 = vld [vmem:[#allocation4 + $0x3a0] sm:$0xf]
    %v490 = vld [vmem:[#allocation4 + $0x3a4] sm:$0xf]
    %v491 = vld [vmem:[#allocation4 + $0x3a8] sm:$0xf]
    %v492 = vld [vmem:[#allocation4 + $0x3ac] sm:$0xf]
    %v493 = vld [vmem:[#allocation4 + $0x3b0] sm:$0xf]
    %v494 = vld [vmem:[#allocation4 + $0x3b4] sm:$0xf]
    %v495 = vld [vmem:[#allocation4 + $0x3b8] sm:$0xf]
    %v496 = vld [vmem:[#allocation4 + $0x3bc] sm:$0xf]
    %v497 = vld [vmem:[#allocation4 + $0x3c0] sm:$0xf]
    %v498 = vld [vmem:[#allocation4 + $0x3c4] sm:$0xf]
    %v499 = vld [vmem:[#allocation4 + $0x3c8] sm:$0xf]
    %v500 = vld [vmem:[#allocation4 + $0x3cc] sm:$0xf]
    %v501 = vld [vmem:[#allocation4 + $0x3d0] sm:$0xf]
    %v502 = vld [vmem:[#allocation4 + $0x3d4] sm:$0xf]
    %v503 = vld [vmem:[#allocation4 + $0x3d8] sm:$0xf]
    %v504 = vld [vmem:[#allocation4 + $0x3dc] sm:$0xf]
    %v505 = vld [vmem:[#allocation4 + $0x3e0] sm:$0xf]
    %v506 = vld [vmem:[#allocation4 + $0x3e4] sm:$0xf]
    %v507 = vld [vmem:[#allocation4 + $0x3e8] sm:$0xf]
    %v508 = vld [vmem:[#allocation4 + $0x3ec] sm:$0xf]
    %v509 = vld [vmem:[#allocation4 + $0x3f0] sm:$0xf]
    %v510 = vld [vmem:[#allocation4 + $0x3f4] sm:$0xf]
    %v511 = vld [vmem:[#allocation4 + $0x3f8] sm:$0xf]
    %v512 = vld [vmem:[#allocation4 + $0x3fc] sm:$0xf]
    %v513 = vld [vmem:[#allocation4 + $0x400] sm:$0xf]
    %v514 = vld [vmem:[#allocation4 + $0x404] sm:$0xf]
    %v515 = vld [vmem:[#allocation4 + $0x408] sm:$0xf]
    %v516 = vld [vmem:[#allocation4 + $0x40c] sm:$0xf]
    %v517 = vld [vmem:[#allocation4 + $0x410] sm:$0xf]
    %v518 = vld [vmem:[#allocation4 + $0x414] sm:$0xf]
    %v519 = vld [vmem:[#allocation4 + $0x418] sm:$0xf]
    %v520 = vld [vmem:[#allocation4 + $0x41c] sm:$0xf]
    %v521 = vld [vmem:[#allocation4 + $0x420] sm:$0xf]
    %v522 = vld [vmem:[#allocation4 + $0x424] sm:$0xf]
    %v523 = vld [vmem:[#allocation4 + $0x428] sm:$0xf]
    %v524 = vld [vmem:[#allocation4 + $0x42c] sm:$0xf]
    %v525 = vld [vmem:[#allocation4 + $0x430] sm:$0xf]
    %v526 = vld [vmem:[#allocation4 + $0x434] sm:$0xf]
    %v527 = vld [vmem:[#allocation4 + $0x438] sm:$0xf]
    %v528 = vld [vmem:[#allocation4 + $0x43c] sm:$0xf]
    %v529 = vld [vmem:[#allocation4 + $0x440] sm:$0xf]
    %v530 = vld [vmem:[#allocation4 + $0x444] sm:$0xf]
    %v531 = vld [vmem:[#allocation4 + $0x448] sm:$0xf]
    %v532 = vld [vmem:[#allocation4 + $0x44c] sm:$0xf]
    %v533 = vld [vmem:[#allocation4 + $0x450] sm:$0xf]
    %v534 = vld [vmem:[#allocation4 + $0x454] sm:$0xf]
    %v535 = vld [vmem:[#allocation4 + $0x458] sm:$0xf]
    %v536 = vld [vmem:[#allocation4 + $0x45c] sm:$0xf]
    %v537 = vld [vmem:[#allocation4 + $0x460] sm:$0xf]
    %v538 = vld [vmem:[#allocation4 + $0x464] sm:$0xf]
    %v539 = vld [vmem:[#allocation4 + $0x468] sm:$0xf]
    %v540 = vld [vmem:[#allocation4 + $0x46c] sm:$0xf]
    %v541 = vld [vmem:[#allocation4 + $0x470] sm:$0xf]
    %v542 = vld [vmem:[#allocation4 + $0x474] sm:$0xf]
    %v543 = vld [vmem:[#allocation4 + $0x478] sm:$0xf]
    %v544 = vld [vmem:[#allocation4 + $0x47c] sm:$0xf]
    %v545 = vld [vmem:[#allocation4 + $0x480] sm:$0xf]
    %v546 = vld [vmem:[#allocation4 + $0x484] sm:$0xf]
    %v547 = vld [vmem:[#allocation4 + $0x488] sm:$0xf]
    %v548 = vld [vmem:[#allocation4 + $0x48c] sm:$0xf]
    %v549 = vld [vmem:[#allocation4 + $0x490] sm:$0xf]
    %v550 = vld [vmem:[#allocation4 + $0x494] sm:$0xf]
    %v551 = vld [vmem:[#allocation4 + $0x498] sm:$0xf]
    %v552 = vld [vmem:[#allocation4 + $0x49c] sm:$0xf]
    %v553 = vld [vmem:[#allocation4 + $0x4a0] sm:$0xf]
    %v554 = vld [vmem:[#allocation4 + $0x4a4] sm:$0xf]
    %v555 = vld [vmem:[#allocation4 + $0x4a8] sm:$0xf]
    %v556 = vld [vmem:[#allocation4 + $0x4ac] sm:$0xf]
    %v557 = vld [vmem:[#allocation4 + $0x4b0] sm:$0xf]
    %v558 = vld [vmem:[#allocation4 + $0x4b4] sm:$0xf]
    %v559 = vld [vmem:[#allocation4 + $0x4b8] sm:$0xf]
    %v560 = vld [vmem:[#allocation4 + $0x4bc] sm:$0xf]
    %v561 = vld [vmem:[#allocation4 + $0x4c0] sm:$0xf]
    %v562 = vld [vmem:[#allocation4 + $0x4c4] sm:$0xf]
    %v563 = vld [vmem:[#allocation4 + $0x4c8] sm:$0xf]
    %v564 = vld [vmem:[#allocation4 + $0x4cc] sm:$0xf]
    %v565 = vld [vmem:[#allocation4 + $0x4d0] sm:$0xf]
    %v566 = vld [vmem:[#allocation4 + $0x4d4] sm:$0xf]
    %v567 = vld [vmem:[#allocation4 + $0x4d8] sm:$0xf]
    %v568 = vld [vmem:[#allocation4 + $0x4dc] sm:$0xf]
    %v569 = vld [vmem:[#allocation4 + $0x4e0] sm:$0xf]
    %v570 = vld [vmem:[#allocation4 + $0x4e4] sm:$0xf]
    %v571 = vld [vmem:[#allocation4 + $0x4e8] sm:$0xf]
    %v572 = vld [vmem:[#allocation4 + $0x4ec] sm:$0xf]
    %v573 = vld [vmem:[#allocation4 + $0x4f0] sm:$0xf]
    %v574 = vld [vmem:[#allocation4 + $0x4f4] sm:$0xf]
    %v575 = vld [vmem:[#allocation4 + $0x4f8] sm:$0xf]
    %v576 = vld [vmem:[#allocation4 + $0x4fc] sm:$0xf]
    %v577 = vld [vmem:[#allocation4 + $0x500] sm:$0xf]
    %v578 = vld [vmem:[#allocation4 + $0x504] sm:$0xf]
    %v579 = vld [vmem:[#allocation4 + $0x508] sm:$0xf]
    %v580 = vld [vmem:[#allocation4 + $0x50c] sm:$0xf]
    %v581 = vld [vmem:[#allocation4 + $0x510] sm:$0xf]
    %v582 = vld [vmem:[#allocation4 + $0x514] sm:$0xf]
    %v583 = vld [vmem:[#allocation4 + $0x518] sm:$0xf]
    %v584 = vld [vmem:[#allocation4 + $0x51c] sm:$0xf]
    %v585 = vld [vmem:[#allocation4 + $0x520] sm:$0xf]
    %v586 = vld [vmem:[#allocation4 + $0x524] sm:$0xf]
    %v587 = vld [vmem:[#allocation4 + $0x528] sm:$0xf]
    %v588 = vld [vmem:[#allocation4 + $0x52c] sm:$0xf]
    %v589 = vld [vmem:[#allocation4 + $0x530] sm:$0xf]
    %v590 = vld [vmem:[#allocation4 + $0x534] sm:$0xf]
    %v591 = vld [vmem:[#allocation4 + $0x538] sm:$0xf]
    %v592 = vld [vmem:[#allocation4 + $0x53c] sm:$0xf]
    %v593 = vld [vmem:[#allocation4 + $0x540] sm:$0xf]
    %v594 = vld [vmem:[#allocation4 + $0x544] sm:$0xf]
    %v595 = vld [vmem:[#allocation4 + $0x548] sm:$0xf]
    %v596 = vld [vmem:[#allocation4 + $0x54c] sm:$0xf]
    %v597 = vld [vmem:[#allocation4 + $0x550] sm:$0xf]
    %v598 = vld [vmem:[#allocation4 + $0x554] sm:$0xf]
    %v599 = vld [vmem:[#allocation4 + $0x558] sm:$0xf]
    %v600 = vld [vmem:[#allocation4 + $0x55c] sm:$0xf]
    %v601 = vld [vmem:[#allocation4 + $0x560] sm:$0xf]
    %v602 = vld [vmem:[#allocation4 + $0x564] sm:$0xf]
    %v603 = vld [vmem:[#allocation4 + $0x568] sm:$0xf]
    %v604 = vld [vmem:[#allocation4 + $0x56c] sm:$0xf]
    %v605 = vld [vmem:[#allocation4 + $0x570] sm:$0xf]
    %v606 = vld [vmem:[#allocation4 + $0x574] sm:$0xf]
    %v607 = vld [vmem:[#allocation4 + $0x578] sm:$0xf]
    %v608 = vld [vmem:[#allocation4 + $0x57c] sm:$0xf]
    %v609 = vld [vmem:[#allocation4 + $0x580] sm:$0xf]
    %v610 = vld [vmem:[#allocation4 + $0x584] sm:$0xf]
    %v611 = vld [vmem:[#allocation4 + $0x588] sm:$0xf]
    %v612 = vld [vmem:[#allocation4 + $0x58c] sm:$0xf]
    %v613 = vld [vmem:[#allocation4 + $0x590] sm:$0xf]
    %v614 = vld [vmem:[#allocation4 + $0x594] sm:$0xf]
    %v615 = vld [vmem:[#allocation4 + $0x598] sm:$0xf]
    %v616 = vld [vmem:[#allocation4 + $0x59c] sm:$0xf]
    %v617 = vld [vmem:[#allocation4 + $0x5a0] sm:$0xf]
    %v618 = vld [vmem:[#allocation4 + $0x5a4] sm:$0xf]
    %v619 = vld [vmem:[#allocation4 + $0x5a8] sm:$0xf]
    %v620 = vld [vmem:[#allocation4 + $0x5ac] sm:$0xf]
    %v621 = vld [vmem:[#allocation4 + $0x5b0] sm:$0xf]
    %v622 = vld [vmem:[#allocation4 + $0x5b4] sm:$0xf]
    %v623 = vld [vmem:[#allocation4 + $0x5b8] sm:$0xf]
    %v624 = vld [vmem:[#allocation4 + $0x5bc] sm:$0xf]
    %v625 = vld [vmem:[#allocation4 + $0x5c0] sm:$0xf]
    %v626 = vld [vmem:[#allocation4 + $0x5c4] sm:$0xf]
    %v627 = vld [vmem:[#allocation4 + $0x5c8] sm:$0xf]
    %v628 = vld [vmem:[#allocation4 + $0x5cc] sm:$0xf]
    %v629 = vld [vmem:[#allocation4 + $0x5d0] sm:$0xf]
    %v630 = vld [vmem:[#allocation4 + $0x5d4] sm:$0xf]
    %v631 = vld [vmem:[#allocation4 + $0x5d8] sm:$0xf]
    %v632 = vld [vmem:[#allocation4 + $0x5dc] sm:$0xf]
    %v633 = vld [vmem:[#allocation4 + $0x5e0] sm:$0xf]
    %v634 = vld [vmem:[#allocation4 + $0x5e4] sm:$0xf]
    %v635 = vld [vmem:[#allocation4 + $0x5e8] sm:$0xf]
    %v636 = vld [vmem:[#allocation4 + $0x5ec] sm:$0xf]
    %v637 = vld [vmem:[#allocation4 + $0x5f0] sm:$0xf]
    %v638 = vld [vmem:[#allocation4 + $0x5f4] sm:$0xf]
    %v639 = vld [vmem:[#allocation4 + $0x5f8] sm:$0xf]
    %v640 = vld [vmem:[#allocation4 + $0x5fc] sm:$0xf]
    %v641 = vld [vmem:[#allocation4 + $0x600] sm:$0xf]
    %v642 = vld [vmem:[#allocation4 + $0x604] sm:$0xf]
    %v643 = vld [vmem:[#allocation4 + $0x608] sm:$0xf]
    %v644 = vld [vmem:[#allocation4 + $0x60c] sm:$0xf]
    %v645 = vld [vmem:[#allocation4 + $0x610] sm:$0xf]
    %v646 = vld [vmem:[#allocation4 + $0x614] sm:$0xf]
    %v647 = vld [vmem:[#allocation4 + $0x618] sm:$0xf]
    %v648 = vld [vmem:[#allocation4 + $0x61c] sm:$0xf]
    %v649 = vld [vmem:[#allocation4 + $0x620] sm:$0xf]
    %v650 = vld [vmem:[#allocation4 + $0x624] sm:$0xf]
    %v651 = vld [vmem:[#allocation4 + $0x628] sm:$0xf]
    %v652 = vld [vmem:[#allocation4 + $0x62c] sm:$0xf]
    %v653 = vld [vmem:[#allocation4 + $0x630] sm:$0xf]
    %v654 = vld [vmem:[#allocation4 + $0x634] sm:$0xf]
    %v655 = vld [vmem:[#allocation4 + $0x638] sm:$0xf]
    %v656 = vld [vmem:[#allocation4 + $0x63c] sm:$0xf]
    %v657 = vld [vmem:[#allocation4 + $0x640] sm:$0xf]
    %v658 = vld [vmem:[#allocation4 + $0x644] sm:$0xf]
    %v659 = vld [vmem:[#allocation4 + $0x648] sm:$0xf]
    %v660 = vld [vmem:[#allocation4 + $0x64c] sm:$0xf]
    %v661 = vld [vmem:[#allocation4 + $0x650] sm:$0xf]
    %v662 = vld [vmem:[#allocation4 + $0x654] sm:$0xf]
    %v663 = vld [vmem:[#allocation4 + $0x658] sm:$0xf]
    %v664 = vld [vmem:[#allocation4 + $0x65c] sm:$0xf]
    %v665 = vld [vmem:[#allocation4 + $0x660] sm:$0xf]
    %v666 = vld [vmem:[#allocation4 + $0x664] sm:$0xf]
    %v667 = vld [vmem:[#allocation4 + $0x668] sm:$0xf]
    %v668 = vld [vmem:[#allocation4 + $0x66c] sm:$0xf]
    %v669 = vld [vmem:[#allocation4 + $0x670] sm:$0xf]
    %v670 = vld [vmem:[#allocation4 + $0x674] sm:$0xf]
    %v671 = vld [vmem:[#allocation4 + $0x678] sm:$0xf]
    %v672 = vld [vmem:[#allocation4 + $0x67c] sm:$0xf]
    %v673 = vld [vmem:[#allocation4 + $0x680] sm:$0xf]
    %v674 = vld [vmem:[#allocation4 + $0x684] sm:$0xf]
    %v675 = vld [vmem:[#allocation4 + $0x688] sm:$0xf]
    %v676 = vld [vmem:[#allocation4 + $0x68c] sm:$0xf]
    %v677 = vld [vmem:[#allocation4 + $0x690] sm:$0xf]
    %v678 = vld [vmem:[#allocation4 + $0x694] sm:$0xf]
    %v679 = vld [vmem:[#allocation4 + $0x698] sm:$0xf]
    %v680 = vld [vmem:[#allocation4 + $0x69c] sm:$0xf]
    %v681 = vld [vmem:[#allocation4 + $0x6a0] sm:$0xf]
    %v682 = vld [vmem:[#allocation4 + $0x6a4] sm:$0xf]
    %v683 = vld [vmem:[#allocation4 + $0x6a8] sm:$0xf]
    %v684 = vld [vmem:[#allocation4 + $0x6ac] sm:$0xf]
    %v685 = vld [vmem:[#allocation4 + $0x6b0] sm:$0xf]
    %v686 = vld [vmem:[#allocation4 + $0x6b4] sm:$0xf]
    %v687 = vld [vmem:[#allocation4 + $0x6b8] sm:$0xf]
    %v688 = vld [vmem:[#allocation4 + $0x6bc] sm:$0xf]
    %v689 = vld [vmem:[#allocation4 + $0x6c0] sm:$0xf]
    %v690 = vld [vmem:[#allocation4 + $0x6c4] sm:$0xf]
    %v691 = vld [vmem:[#allocation4 + $0x6c8] sm:$0xf]
    %v692 = vld [vmem:[#allocation4 + $0x6cc] sm:$0xf]
    %v693 = vld [vmem:[#allocation4 + $0x6d0] sm:$0xf]
    %v694 = vld [vmem:[#allocation4 + $0x6d4] sm:$0xf]
    %v695 = vld [vmem:[#allocation4 + $0x6d8] sm:$0xf]
    %v696 = vld [vmem:[#allocation4 + $0x6dc] sm:$0xf]
    %v697 = vld [vmem:[#allocation4 + $0x6e0] sm:$0xf]
    %v698 = vld [vmem:[#allocation4 + $0x6e4] sm:$0xf]
    %v699 = vld [vmem:[#allocation4 + $0x6e8] sm:$0xf]
    %v700 = vld [vmem:[#allocation4 + $0x6ec] sm:$0xf]
    %v701 = vld [vmem:[#allocation4 + $0x6f0] sm:$0xf]
    %v702 = vld [vmem:[#allocation4 + $0x6f4] sm:$0xf]
    %v703 = vld [vmem:[#allocation4 + $0x6f8] sm:$0xf]
    %v704 = vld [vmem:[#allocation4 + $0x6fc] sm:$0xf]
    %v705 = vld [vmem:[#allocation4 + $0x700] sm:$0xf]
    %v706 = vld [vmem:[#allocation4 + $0x704] sm:$0xf]
    %v707 = vld [vmem:[#allocation4 + $0x708] sm:$0xf]
    %v708 = vld [vmem:[#allocation4 + $0x70c] sm:$0xf]
    %v709 = vld [vmem:[#allocation4 + $0x710] sm:$0xf]
    %v710 = vld [vmem:[#allocation4 + $0x714] sm:$0xf]
    %v711 = vld [vmem:[#allocation4 + $0x718] sm:$0xf]
    %v712 = vld [vmem:[#allocation4 + $0x71c] sm:$0xf]
    %v713 = vld [vmem:[#allocation4 + $0x720] sm:$0xf]
    %v714 = vld [vmem:[#allocation4 + $0x724] sm:$0xf]
    %v715 = vld [vmem:[#allocation4 + $0x728] sm:$0xf]
    %v716 = vld [vmem:[#allocation4 + $0x72c] sm:$0xf]
    %v717 = vld [vmem:[#allocation4 + $0x730] sm:$0xf]
    %v718 = vld [vmem:[#allocation4 + $0x734] sm:$0xf]
    %v719 = vld [vmem:[#allocation4 + $0x738] sm:$0xf]
    %v720 = vld [vmem:[#allocation4 + $0x73c] sm:$0xf]
    %v721 = vld [vmem:[#allocation4 + $0x740] sm:$0xf]
    %v722 = vld [vmem:[#allocation4 + $0x744] sm:$0xf]
    %v723 = vld [vmem:[#allocation4 + $0x748] sm:$0xf]
    %v724 = vld [vmem:[#allocation4 + $0x74c] sm:$0xf]
    %v725 = vld [vmem:[#allocation4 + $0x750] sm:$0xf]
    %v726 = vld [vmem:[#allocation4 + $0x754] sm:$0xf]
    %v727 = vld [vmem:[#allocation4 + $0x758] sm:$0xf]
    %v728 = vld [vmem:[#allocation4 + $0x75c] sm:$0xf]
    %v729 = vld [vmem:[#allocation4 + $0x760] sm:$0xf]
    %v730 = vld [vmem:[#allocation4 + $0x764] sm:$0xf]
    %v731 = vld [vmem:[#allocation4 + $0x768] sm:$0xf]
    %v732 = vld [vmem:[#allocation4 + $0x76c] sm:$0xf]
    %v733 = vld [vmem:[#allocation4 + $0x770] sm:$0xf]
    %v734 = vld [vmem:[#allocation4 + $0x774] sm:$0xf]
    %v735 = vld [vmem:[#allocation4 + $0x778] sm:$0xf]
    %v736 = vld [vmem:[#allocation4 + $0x77c] sm:$0xf]
    %v737 = vld [vmem:[#allocation4 + $0x780] sm:$0xf]
    %v738 = vld [vmem:[#allocation4 + $0x784] sm:$0xf]
    %v739 = vld [vmem:[#allocation4 + $0x788] sm:$0xf]
    %v740 = vld [vmem:[#allocation4 + $0x78c] sm:$0xf]
    %v741 = vld [vmem:[#allocation4 + $0x790] sm:$0xf]
    %v742 = vld [vmem:[#allocation4 + $0x794] sm:$0xf]
    %v743 = vld [vmem:[#allocation4 + $0x798] sm:$0xf]
    %v744 = vld [vmem:[#allocation4 + $0x79c] sm:$0xf]
    %v745 = vld [vmem:[#allocation4 + $0x7a0] sm:$0xf]
    %v746 = vld [vmem:[#allocation4 + $0x7a4] sm:$0xf]
    %v747 = vld [vmem:[#allocation4 + $0x7a8] sm:$0xf]
    %v748 = vld [vmem:[#allocation4 + $0x7ac] sm:$0xf]
    %v749 = vld [vmem:[#allocation4 + $0x7b0] sm:$0xf]
    %v750 = vld [vmem:[#allocation4 + $0x7b4] sm:$0xf]
    %v751 = vld [vmem:[#allocation4 + $0x7b8] sm:$0xf]
    %v752 = vld [vmem:[#allocation4 + $0x7bc] sm:$0xf]
    %v753 = vld [vmem:[#allocation4 + $0x7c0] sm:$0xf]
    %v754 = vld [vmem:[#allocation4 + $0x7c4] sm:$0xf]
    %v755 = vld [vmem:[#allocation4 + $0x7c8] sm:$0xf]
    %v756 = vld [vmem:[#allocation4 + $0x7cc] sm:$0xf]
    %v757 = vld [vmem:[#allocation4 + $0x7d0] sm:$0xf]
    %v758 = vld [vmem:[#allocation4 + $0x7d4] sm:$0xf]
    %v759 = vld [vmem:[#allocation4 + $0x7d8] sm:$0xf]
    %v760 = vld [vmem:[#allocation4 + $0x7dc] sm:$0xf]
    %v761 = vld [vmem:[#allocation4 + $0x7e0] sm:$0xf]
    %v762 = vld [vmem:[#allocation4 + $0x7e4] sm:$0xf]
    %v763 = vld [vmem:[#allocation4 + $0x7e8] sm:$0xf]
    %v764 = vld [vmem:[#allocation4 + $0x7ec] sm:$0xf]
    %v765 = vld [vmem:[#allocation4 + $0x7f0] sm:$0xf]
    %v766 = vld [vmem:[#allocation4 + $0x7f4] sm:$0xf]
    %v767 = vld [vmem:[#allocation4 + $0x7f8] sm:$0xf]
    %v768 = vld [vmem:[#allocation4 + $0x7fc] sm:$0xf]
    %v769 = vld [vmem:[%s2] sm:$0x1]
    %v771 = vlaneseq
    %v772 = vshrl.u32 %v771, 7
    %v773 = vsub.s32 0, %v772
    %v774 = vrot.slane %v769, %v773
    %v1288 = vunpack.c.l.b16 %v257
    %v1289 = vunpack.c.l.b16 %v258
    %v1290 = vunpack.c.l.b16 %v259
    %v1291 = vunpack.c.l.b16 %v260
    %v1292 = vunpack.c.l.b16 %v261
    %v1293 = vunpack.c.l.b16 %v262
    %v1294 = vunpack.c.l.b16 %v263
    %v1295 = vunpack.c.l.b16 %v264
    %v1296 = vunpack.c.l.b16 %v265
    %v1297 = vunpack.c.l.b16 %v266
    %v1298 = vunpack.c.l.b16 %v267
    %v1299 = vunpack.c.l.b16 %v268
    %v1300 = vunpack.c.l.b16 %v269
    %v1301 = vunpack.c.l.b16 %v270
    %v1302 = vunpack.c.l.b16 %v271
    %v1303 = vunpack.c.l.b16 %v272
    %v1304 = vunpack.c.l.b16 %v273
    %v1305 = vunpack.c.l.b16 %v274
    %v1306 = vunpack.c.l.b16 %v275
    %v1307 = vunpack.c.l.b16 %v276
    %v1308 = vunpack.c.l.b16 %v277
    %v1309 = vunpack.c.l.b16 %v278
    %v1310 = vunpack.c.l.b16 %v279
    %v1311 = vunpack.c.l.b16 %v280
    %v1312 = vunpack.c.l.b16 %v281
    %v1313 = vunpack.c.l.b16 %v282
    %v1314 = vunpack.c.l.b16 %v283
    %v1315 = vunpack.c.l.b16 %v284
    %v1316 = vunpack.c.l.b16 %v285
    %v1317 = vunpack.c.l.b16 %v286
    %v1318 = vunpack.c.l.b16 %v287
    %v1319 = vunpack.c.l.b16 %v288
    %v1320 = vunpack.c.l.b16 %v289
    %v1321 = vunpack.c.l.b16 %v290
    %v1322 = vunpack.c.l.b16 %v291
    %v1323 = vunpack.c.l.b16 %v292
    %v1324 = vunpack.c.l.b16 %v293
    %v1325 = vunpack.c.l.b16 %v294
    %v1326 = vunpack.c.l.b16 %v295
    %v1327 = vunpack.c.l.b16 %v296
    %v1328 = vunpack.c.l.b16 %v297
    %v1329 = vunpack.c.l.b16 %v298
    %v1330 = vunpack.c.l.b16 %v299
    %v1331 = vunpack.c.l.b16 %v300
    %v1332 = vunpack.c.l.b16 %v301
    %v1333 = vunpack.c.l.b16 %v302
    %v1334 = vunpack.c.l.b16 %v303
    %v1335 = vunpack.c.l.b16 %v304
    %v1336 = vunpack.c.l.b16 %v305
    %v1337 = vunpack.c.l.b16 %v306
    %v1338 = vunpack.c.l.b16 %v307
    %v1339 = vunpack.c.l.b16 %v308
    %v1340 = vunpack.c.l.b16 %v309
    %v1341 = vunpack.c.l.b16 %v310
    %v1342 = vunpack.c.l.b16 %v311
    %v1343 = vunpack.c.l.b16 %v312
    %v1344 = vunpack.c.l.b16 %v313
    %v1345 = vunpack.c.l.b16 %v314
    %v1346 = vunpack.c.l.b16 %v315
    %v1347 = vunpack.c.l.b16 %v316
    %v1348 = vunpack.c.l.b16 %v317
    %v1349 = vunpack.c.l.b16 %v318
    %v1350 = vunpack.c.l.b16 %v319
    %v1351 = vunpack.c.l.b16 %v320
    %v1352 = vunpack.c.l.b16 %v321
    %v1353 = vunpack.c.l.b16 %v322
    %v1354 = vunpack.c.l.b16 %v323
    %v1355 = vunpack.c.l.b16 %v324
    %v1356 = vunpack.c.l.b16 %v325
    %v1357 = vunpack.c.l.b16 %v326
    %v1358 = vunpack.c.l.b16 %v327
    %v1359 = vunpack.c.l.b16 %v328
    %v1360 = vunpack.c.l.b16 %v329
    %v1361 = vunpack.c.l.b16 %v330
    %v1362 = vunpack.c.l.b16 %v331
    %v1363 = vunpack.c.l.b16 %v332
    %v1364 = vunpack.c.l.b16 %v333
    %v1365 = vunpack.c.l.b16 %v334
    %v1366 = vunpack.c.l.b16 %v335
    %v1367 = vunpack.c.l.b16 %v336
    %v1368 = vunpack.c.l.b16 %v337
    %v1369 = vunpack.c.l.b16 %v338
    %v1370 = vunpack.c.l.b16 %v339
    %v1371 = vunpack.c.l.b16 %v340
    %v1372 = vunpack.c.l.b16 %v341
    %v1373 = vunpack.c.l.b16 %v342
    %v1374 = vunpack.c.l.b16 %v343
    %v1375 = vunpack.c.l.b16 %v344
    %v1376 = vunpack.c.l.b16 %v345
    %v1377 = vunpack.c.l.b16 %v346
    %v1378 = vunpack.c.l.b16 %v347
    %v1379 = vunpack.c.l.b16 %v348
    %v1380 = vunpack.c.l.b16 %v349
    %v1381 = vunpack.c.l.b16 %v350
    %v1382 = vunpack.c.l.b16 %v351
    %v1383 = vunpack.c.l.b16 %v352
    %v1384 = vunpack.c.l.b16 %v353
    %v1385 = vunpack.c.l.b16 %v354
    %v1386 = vunpack.c.l.b16 %v355
    %v1387 = vunpack.c.l.b16 %v356
    %v1388 = vunpack.c.l.b16 %v357
    %v1389 = vunpack.c.l.b16 %v358
    %v1390 = vunpack.c.l.b16 %v359
    %v1391 = vunpack.c.l.b16 %v360
    %v1392 = vunpack.c.l.b16 %v361
    %v1393 = vunpack.c.l.b16 %v362
    %v1394 = vunpack.c.l.b16 %v363
    %v1395 = vunpack.c.l.b16 %v364
    %v1396 = vunpack.c.l.b16 %v365
    %v1397 = vunpack.c.l.b16 %v366
    %v1398 = vunpack.c.l.b16 %v367
    %v1399 = vunpack.c.l.b16 %v368
    %v1400 = vunpack.c.l.b16 %v369
    %v1401 = vunpack.c.l.b16 %v370
    %v1402 = vunpack.c.l.b16 %v371
    %v1403 = vunpack.c.l.b16 %v372
    %v1404 = vunpack.c.l.b16 %v373
    %v1405 = vunpack.c.l.b16 %v374
    %v1406 = vunpack.c.l.b16 %v375
    %v1407 = vunpack.c.l.b16 %v376
    %v1408 = vunpack.c.l.b16 %v377
    %v1409 = vunpack.c.l.b16 %v378
    %v1410 = vunpack.c.l.b16 %v379
    %v1411 = vunpack.c.l.b16 %v380
    %v1412 = vunpack.c.l.b16 %v381
    %v1413 = vunpack.c.l.b16 %v382
    %v1414 = vunpack.c.l.b16 %v383
    %v1415 = vunpack.c.l.b16 %v384
    %v1416 = vunpack.c.l.b16 %v385
    %v1417 = vunpack.c.l.b16 %v386
    %v1418 = vunpack.c.l.b16 %v387
    %v1419 = vunpack.c.l.b16 %v388
    %v1420 = vunpack.c.l.b16 %v389
    %v1421 = vunpack.c.l.b16 %v390
    %v1422 = vunpack.c.l.b16 %v391
    %v1423 = vunpack.c.l.b16 %v392
    %v1424 = vunpack.c.l.b16 %v393
    %v1425 = vunpack.c.l.b16 %v394
    %v1426 = vunpack.c.l.b16 %v395
    %v1427 = vunpack.c.l.b16 %v396
    %v1428 = vunpack.c.l.b16 %v397
    %v1429 = vunpack.c.l.b16 %v398
    %v1430 = vunpack.c.l.b16 %v399
    %v1431 = vunpack.c.l.b16 %v400
    %v1432 = vunpack.c.l.b16 %v401
    %v1433 = vunpack.c.l.b16 %v402
    %v1434 = vunpack.c.l.b16 %v403
    %v1435 = vunpack.c.l.b16 %v404
    %v1436 = vunpack.c.l.b16 %v405
    %v1437 = vunpack.c.l.b16 %v406
    %v1438 = vunpack.c.l.b16 %v407
    %v1439 = vunpack.c.l.b16 %v408
    %v1440 = vunpack.c.l.b16 %v409
    %v1441 = vunpack.c.l.b16 %v410
    %v1442 = vunpack.c.l.b16 %v411
    %v1443 = vunpack.c.l.b16 %v412
    %v1444 = vunpack.c.l.b16 %v413
    %v1445 = vunpack.c.l.b16 %v414
    %v1446 = vunpack.c.l.b16 %v415
    %v1447 = vunpack.c.l.b16 %v416
    %v1448 = vunpack.c.l.b16 %v417
    %v1449 = vunpack.c.l.b16 %v418
    %v1450 = vunpack.c.l.b16 %v419
    %v1451 = vunpack.c.l.b16 %v420
    %v1452 = vunpack.c.l.b16 %v421
    %v1453 = vunpack.c.l.b16 %v422
    %v1454 = vunpack.c.l.b16 %v423
    %v1455 = vunpack.c.l.b16 %v424
    %v1456 = vunpack.c.l.b16 %v425
    %v1457 = vunpack.c.l.b16 %v426
    %v1458 = vunpack.c.l.b16 %v427
    %v1459 = vunpack.c.l.b16 %v428
    %v1460 = vunpack.c.l.b16 %v429
    %v1461 = vunpack.c.l.b16 %v430
    %v1462 = vunpack.c.l.b16 %v431
    %v1463 = vunpack.c.l.b16 %v432
    %v1464 = vunpack.c.l.b16 %v433
    %v1465 = vunpack.c.l.b16 %v434
    %v1466 = vunpack.c.l.b16 %v435
    %v1467 = vunpack.c.l.b16 %v436
    %v1468 = vunpack.c.l.b16 %v437
    %v1469 = vunpack.c.l.b16 %v438
    %v1470 = vunpack.c.l.b16 %v439
    %v1471 = vunpack.c.l.b16 %v440
    %v1472 = vunpack.c.l.b16 %v441
    %v1473 = vunpack.c.l.b16 %v442
    %v1474 = vunpack.c.l.b16 %v443
    %v1475 = vunpack.c.l.b16 %v444
    %v1476 = vunpack.c.l.b16 %v445
    %v1477 = vunpack.c.l.b16 %v446
    %v1478 = vunpack.c.l.b16 %v447
    %v1479 = vunpack.c.l.b16 %v448
    %v1480 = vunpack.c.l.b16 %v449
    %v1481 = vunpack.c.l.b16 %v450
    %v1482 = vunpack.c.l.b16 %v451
    %v1483 = vunpack.c.l.b16 %v452
    %v1484 = vunpack.c.l.b16 %v453
    %v1485 = vunpack.c.l.b16 %v454
    %v1486 = vunpack.c.l.b16 %v455
    %v1487 = vunpack.c.l.b16 %v456
    %v1488 = vunpack.c.l.b16 %v457
    %v1489 = vunpack.c.l.b16 %v458
    %v1490 = vunpack.c.l.b16 %v459
    %v1491 = vunpack.c.l.b16 %v460
    %v1492 = vunpack.c.l.b16 %v461
    %v1493 = vunpack.c.l.b16 %v462
    %v1494 = vunpack.c.l.b16 %v463
    %v1495 = vunpack.c.l.b16 %v464
    %v1496 = vunpack.c.l.b16 %v465
    %v1497 = vunpack.c.l.b16 %v466
    %v1498 = vunpack.c.l.b16 %v467
    %v1499 = vunpack.c.l.b16 %v468
    %v1500 = vunpack.c.l.b16 %v469
    %v1501 = vunpack.c.l.b16 %v470
    %v1502 = vunpack.c.l.b16 %v471
    %v1503 = vunpack.c.l.b16 %v472
    %v1504 = vunpack.c.l.b16 %v473
    %v1505 = vunpack.c.l.b16 %v474
    %v1506 = vunpack.c.l.b16 %v475
    %v1507 = vunpack.c.l.b16 %v476
    %v1508 = vunpack.c.l.b16 %v477
    %v1509 = vunpack.c.l.b16 %v478
    %v1510 = vunpack.c.l.b16 %v479
    %v1511 = vunpack.c.l.b16 %v480
    %v1512 = vunpack.c.l.b16 %v481
    %v1513 = vunpack.c.l.b16 %v482
    %v1514 = vunpack.c.l.b16 %v483
    %v1515 = vunpack.c.l.b16 %v484
    %v1516 = vunpack.c.l.b16 %v485
    %v1517 = vunpack.c.l.b16 %v486
    %v1518 = vunpack.c.l.b16 %v487
    %v1519 = vunpack.c.l.b16 %v488
    %v1520 = vunpack.c.l.b16 %v489
    %v1521 = vunpack.c.l.b16 %v490
    %v1522 = vunpack.c.l.b16 %v491
    %v1523 = vunpack.c.l.b16 %v492
    %v1524 = vunpack.c.l.b16 %v493
    %v1525 = vunpack.c.l.b16 %v494
    %v1526 = vunpack.c.l.b16 %v495
    %v1527 = vunpack.c.l.b16 %v496
    %v1528 = vunpack.c.l.b16 %v497
    %v1529 = vunpack.c.l.b16 %v498
    %v1530 = vunpack.c.l.b16 %v499
    %v1531 = vunpack.c.l.b16 %v500
    %v1532 = vunpack.c.l.b16 %v501
    %v1533 = vunpack.c.l.b16 %v502
    %v1534 = vunpack.c.l.b16 %v503
    %v1535 = vunpack.c.l.b16 %v504
    %v1536 = vunpack.c.l.b16 %v505
    %v1537 = vunpack.c.l.b16 %v506
    %v1538 = vunpack.c.l.b16 %v507
    %v1539 = vunpack.c.l.b16 %v508
    %v1540 = vunpack.c.l.b16 %v509
    %v1541 = vunpack.c.l.b16 %v510
    %v1542 = vunpack.c.l.b16 %v511
    %v1543 = vunpack.c.l.b16 %v512
    %v1544 = vunpack.c.l.b16 %v513
    %v1545 = vunpack.c.l.b16 %v514
    %v1546 = vunpack.c.l.b16 %v515
    %v1547 = vunpack.c.l.b16 %v516
    %v1548 = vunpack.c.l.b16 %v517
    %v1549 = vunpack.c.l.b16 %v518
    %v1550 = vunpack.c.l.b16 %v519
    %v1551 = vunpack.c.l.b16 %v520
    %v1552 = vunpack.c.l.b16 %v521
    %v1553 = vunpack.c.l.b16 %v522
    %v1554 = vunpack.c.l.b16 %v523
    %v1555 = vunpack.c.l.b16 %v524
    %v1556 = vunpack.c.l.b16 %v525
    %v1557 = vunpack.c.l.b16 %v526
    %v1558 = vunpack.c.l.b16 %v527
    %v1559 = vunpack.c.l.b16 %v528
    %v1560 = vunpack.c.l.b16 %v529
    %v1561 = vunpack.c.l.b16 %v530
    %v1562 = vunpack.c.l.b16 %v531
    %v1563 = vunpack.c.l.b16 %v532
    %v1564 = vunpack.c.l.b16 %v533
    %v1565 = vunpack.c.l.b16 %v534
    %v1566 = vunpack.c.l.b16 %v535
    %v1567 = vunpack.c.l.b16 %v536
    %v1568 = vunpack.c.l.b16 %v537
    %v1569 = vunpack.c.l.b16 %v538
    %v1570 = vunpack.c.l.b16 %v539
    %v1571 = vunpack.c.l.b16 %v540
    %v1572 = vunpack.c.l.b16 %v541
    %v1573 = vunpack.c.l.b16 %v542
    %v1574 = vunpack.c.l.b16 %v543
    %v1575 = vunpack.c.l.b16 %v544
    %v1576 = vunpack.c.l.b16 %v545
    %v1577 = vunpack.c.l.b16 %v546
    %v1578 = vunpack.c.l.b16 %v547
    %v1579 = vunpack.c.l.b16 %v548
    %v1580 = vunpack.c.l.b16 %v549
    %v1581 = vunpack.c.l.b16 %v550
    %v1582 = vunpack.c.l.b16 %v551
    %v1583 = vunpack.c.l.b16 %v552
    %v1584 = vunpack.c.l.b16 %v553
    %v1585 = vunpack.c.l.b16 %v554
    %v1586 = vunpack.c.l.b16 %v555
    %v1587 = vunpack.c.l.b16 %v556
    %v1588 = vunpack.c.l.b16 %v557
    %v1589 = vunpack.c.l.b16 %v558
    %v1590 = vunpack.c.l.b16 %v559
    %v1591 = vunpack.c.l.b16 %v560
    %v1592 = vunpack.c.l.b16 %v561
    %v1593 = vunpack.c.l.b16 %v562
    %v1594 = vunpack.c.l.b16 %v563
    %v1595 = vunpack.c.l.b16 %v564
    %v1596 = vunpack.c.l.b16 %v565
    %v1597 = vunpack.c.l.b16 %v566
    %v1598 = vunpack.c.l.b16 %v567
    %v1599 = vunpack.c.l.b16 %v568
    %v1600 = vunpack.c.l.b16 %v569
    %v1601 = vunpack.c.l.b16 %v570
    %v1602 = vunpack.c.l.b16 %v571
    %v1603 = vunpack.c.l.b16 %v572
    %v1604 = vunpack.c.l.b16 %v573
    %v1605 = vunpack.c.l.b16 %v574
    %v1606 = vunpack.c.l.b16 %v575
    %v1607 = vunpack.c.l.b16 %v576
    %v1608 = vunpack.c.l.b16 %v577
    %v1609 = vunpack.c.l.b16 %v578
    %v1610 = vunpack.c.l.b16 %v579
    %v1611 = vunpack.c.l.b16 %v580
    %v1612 = vunpack.c.l.b16 %v581
    %v1613 = vunpack.c.l.b16 %v582
    %v1614 = vunpack.c.l.b16 %v583
    %v1615 = vunpack.c.l.b16 %v584
    %v1616 = vunpack.c.l.b16 %v585
    %v1617 = vunpack.c.l.b16 %v586
    %v1618 = vunpack.c.l.b16 %v587
    %v1619 = vunpack.c.l.b16 %v588
    %v1620 = vunpack.c.l.b16 %v589
    %v1621 = vunpack.c.l.b16 %v590
    %v1622 = vunpack.c.l.b16 %v591
    %v1623 = vunpack.c.l.b16 %v592
    %v1624 = vunpack.c.l.b16 %v593
    %v1625 = vunpack.c.l.b16 %v594
    %v1626 = vunpack.c.l.b16 %v595
    %v1627 = vunpack.c.l.b16 %v596
    %v1628 = vunpack.c.l.b16 %v597
    %v1629 = vunpack.c.l.b16 %v598
    %v1630 = vunpack.c.l.b16 %v599
    %v1631 = vunpack.c.l.b16 %v600
    %v1632 = vunpack.c.l.b16 %v601
    %v1633 = vunpack.c.l.b16 %v602
    %v1634 = vunpack.c.l.b16 %v603
    %v1635 = vunpack.c.l.b16 %v604
    %v1636 = vunpack.c.l.b16 %v605
    %v1637 = vunpack.c.l.b16 %v606
    %v1638 = vunpack.c.l.b16 %v607
    %v1639 = vunpack.c.l.b16 %v608
    %v1640 = vunpack.c.l.b16 %v609
    %v1641 = vunpack.c.l.b16 %v610
    %v1642 = vunpack.c.l.b16 %v611
    %v1643 = vunpack.c.l.b16 %v612
    %v1644 = vunpack.c.l.b16 %v613
    %v1645 = vunpack.c.l.b16 %v614
    %v1646 = vunpack.c.l.b16 %v615
    %v1647 = vunpack.c.l.b16 %v616
    %v1648 = vunpack.c.l.b16 %v617
    %v1649 = vunpack.c.l.b16 %v618
    %v1650 = vunpack.c.l.b16 %v619
    %v1651 = vunpack.c.l.b16 %v620
    %v1652 = vunpack.c.l.b16 %v621
    %v1653 = vunpack.c.l.b16 %v622
    %v1654 = vunpack.c.l.b16 %v623
    %v1655 = vunpack.c.l.b16 %v624
    %v1656 = vunpack.c.l.b16 %v625
    %v1657 = vunpack.c.l.b16 %v626
    %v1658 = vunpack.c.l.b16 %v627
    %v1659 = vunpack.c.l.b16 %v628
    %v1660 = vunpack.c.l.b16 %v629
    %v1661 = vunpack.c.l.b16 %v630
    %v1662 = vunpack.c.l.b16 %v631
    %v1663 = vunpack.c.l.b16 %v632
    %v1664 = vunpack.c.l.b16 %v633
    %v1665 = vunpack.c.l.b16 %v634
    %v1666 = vunpack.c.l.b16 %v635
    %v1667 = vunpack.c.l.b16 %v636
    %v1668 = vunpack.c.l.b16 %v637
    %v1669 = vunpack.c.l.b16 %v638
    %v1670 = vunpack.c.l.b16 %v639
    %v1671 = vunpack.c.l.b16 %v640
    %v1672 = vunpack.c.l.b16 %v641
    %v1673 = vunpack.c.l.b16 %v642
    %v1674 = vunpack.c.l.b16 %v643
    %v1675 = vunpack.c.l.b16 %v644
    %v1676 = vunpack.c.l.b16 %v645
    %v1677 = vunpack.c.l.b16 %v646
    %v1678 = vunpack.c.l.b16 %v647
    %v1679 = vunpack.c.l.b16 %v648
    %v1680 = vunpack.c.l.b16 %v649
    %v1681 = vunpack.c.l.b16 %v650
    %v1682 = vunpack.c.l.b16 %v651
    %v1683 = vunpack.c.l.b16 %v652
    %v1684 = vunpack.c.l.b16 %v653
    %v1685 = vunpack.c.l.b16 %v654
    %v1686 = vunpack.c.l.b16 %v655
    %v1687 = vunpack.c.l.b16 %v656
    %v1688 = vunpack.c.l.b16 %v657
    %v1689 = vunpack.c.l.b16 %v658
    %v1690 = vunpack.c.l.b16 %v659
    %v1691 = vunpack.c.l.b16 %v660
    %v1692 = vunpack.c.l.b16 %v661
    %v1693 = vunpack.c.l.b16 %v662
    %v1694 = vunpack.c.l.b16 %v663
    %v1695 = vunpack.c.l.b16 %v664
    %v1696 = vunpack.c.l.b16 %v665
    %v1697 = vunpack.c.l.b16 %v666
    %v1698 = vunpack.c.l.b16 %v667
    %v1699 = vunpack.c.l.b16 %v668
    %v1700 = vunpack.c.l.b16 %v669
    %v1701 = vunpack.c.l.b16 %v670
    %v1702 = vunpack.c.l.b16 %v671
    %v1703 = vunpack.c.l.b16 %v672
    %v1704 = vunpack.c.l.b16 %v673
    %v1705 = vunpack.c.l.b16 %v674
    %v1706 = vunpack.c.l.b16 %v675
    %v1707 = vunpack.c.l.b16 %v676
    %v1708 = vunpack.c.l.b16 %v677
    %v1709 = vunpack.c.l.b16 %v678
    %v1710 = vunpack.c.l.b16 %v679
    %v1711 = vunpack.c.l.b16 %v680
    %v1712 = vunpack.c.l.b16 %v681
    %v1713 = vunpack.c.l.b16 %v682
    %v1714 = vunpack.c.l.b16 %v683
    %v1715 = vunpack.c.l.b16 %v684
    %v1716 = vunpack.c.l.b16 %v685
    %v1717 = vunpack.c.l.b16 %v686
    %v1718 = vunpack.c.l.b16 %v687
    %v1719 = vunpack.c.l.b16 %v688
    %v1720 = vunpack.c.l.b16 %v689
    %v1721 = vunpack.c.l.b16 %v690
    %v1722 = vunpack.c.l.b16 %v691
    %v1723 = vunpack.c.l.b16 %v692
    %v1724 = vunpack.c.l.b16 %v693
    %v1725 = vunpack.c.l.b16 %v694
    %v1726 = vunpack.c.l.b16 %v695
    %v1727 = vunpack.c.l.b16 %v696
    %v1728 = vunpack.c.l.b16 %v697
    %v1729 = vunpack.c.l.b16 %v698
    %v1730 = vunpack.c.l.b16 %v699
    %v1731 = vunpack.c.l.b16 %v700
    %v1732 = vunpack.c.l.b16 %v701
    %v1733 = vunpack.c.l.b16 %v702
    %v1734 = vunpack.c.l.b16 %v703
    %v1735 = vunpack.c.l.b16 %v704
    %v1736 = vunpack.c.l.b16 %v705
    %v1737 = vunpack.c.l.b16 %v706
    %v1738 = vunpack.c.l.b16 %v707
    %v1739 = vunpack.c.l.b16 %v708
    %v1740 = vunpack.c.l.b16 %v709
    %v1741 = vunpack.c.l.b16 %v710
    %v1742 = vunpack.c.l.b16 %v711
    %v1743 = vunpack.c.l.b16 %v712
    %v1744 = vunpack.c.l.b16 %v713
    %v1745 = vunpack.c.l.b16 %v714
    %v1746 = vunpack.c.l.b16 %v715
    %v1747 = vunpack.c.l.b16 %v716
    %v1748 = vunpack.c.l.b16 %v717
    %v1749 = vunpack.c.l.b16 %v718
    %v1750 = vunpack.c.l.b16 %v719
    %v1751 = vunpack.c.l.b16 %v720
    %v1752 = vunpack.c.l.b16 %v721
    %v1753 = vunpack.c.l.b16 %v722
    %v1754 = vunpack.c.l.b16 %v723
    %v1755 = vunpack.c.l.b16 %v724
    %v1756 = vunpack.c.l.b16 %v725
    %v1757 = vunpack.c.l.b16 %v726
    %v1758 = vunpack.c.l.b16 %v727
    %v1759 = vunpack.c.l.b16 %v728
    %v1760 = vunpack.c.l.b16 %v729
    %v1761 = vunpack.c.l.b16 %v730
    %v1762 = vunpack.c.l.b16 %v731
    %v1763 = vunpack.c.l.b16 %v732
    %v1764 = vunpack.c.l.b16 %v733
    %v1765 = vunpack.c.l.b16 %v734
    %v1766 = vunpack.c.l.b16 %v735
    %v1767 = vunpack.c.l.b16 %v736
    %v1768 = vunpack.c.l.b16 %v737
    %v1769 = vunpack.c.l.b16 %v738
    %v1770 = vunpack.c.l.b16 %v739
    %v1771 = vunpack.c.l.b16 %v740
    %v1772 = vunpack.c.l.b16 %v741
    %v1773 = vunpack.c.l.b16 %v742
    %v1774 = vunpack.c.l.b16 %v743
    %v1775 = vunpack.c.l.b16 %v744
    %v1776 = vunpack.c.l.b16 %v745
    %v1777 = vunpack.c.l.b16 %v746
    %v1778 = vunpack.c.l.b16 %v747
    %v1779 = vunpack.c.l.b16 %v748
    %v1780 = vunpack.c.l.b16 %v749
    %v1781 = vunpack.c.l.b16 %v750
    %v1782 = vunpack.c.l.b16 %v751
    %v1783 = vunpack.c.l.b16 %v752
    %v1784 = vunpack.c.l.b16 %v753
    %v1785 = vunpack.c.l.b16 %v754
    %v1786 = vunpack.c.l.b16 %v755
    %v1787 = vunpack.c.l.b16 %v756
    %v1788 = vunpack.c.l.b16 %v757
    %v1789 = vunpack.c.l.b16 %v758
    %v1790 = vunpack.c.l.b16 %v759
    %v1791 = vunpack.c.l.b16 %v760
    %v1792 = vunpack.c.l.b16 %v761
    %v1793 = vunpack.c.l.b16 %v762
    %v1794 = vunpack.c.l.b16 %v763
    %v1795 = vunpack.c.l.b16 %v764
    %v1796 = vunpack.c.l.b16 %v765
    %v1797 = vunpack.c.l.b16 %v766
    %v1798 = vunpack.c.l.b16 %v767
    %v1799 = vunpack.c.l.b16 %v768
    %v1800 = vpack.c.b16 %v1289, %v1288
    %v1801 = vpack.c.b16 %v1291, %v1290
    %v1802 = vpack.c.b16 %v1293, %v1292
    %v1803 = vpack.c.b16 %v1295, %v1294
    %v1804 = vpack.c.b16 %v1297, %v1296
    %v1805 = vpack.c.b16 %v1299, %v1298
    %v1806 = vpack.c.b16 %v1301, %v1300
    %v1807 = vpack.c.b16 %v1303, %v1302
    %v1808 = vpack.c.b16 %v1305, %v1304
    %v1809 = vpack.c.b16 %v1307, %v1306
    %v1810 = vpack.c.b16 %v1309, %v1308
    %v1811 = vpack.c.b16 %v1311, %v1310
    %v1812 = vpack.c.b16 %v1313, %v1312
    %v1813 = vpack.c.b16 %v1315, %v1314
    %v1814 = vpack.c.b16 %v1317, %v1316
    %v1815 = vpack.c.b16 %v1319, %v1318
    %v1816 = vpack.c.b16 %v1321, %v1320
    %v1817 = vpack.c.b16 %v1323, %v1322
    %v1818 = vpack.c.b16 %v1325, %v1324
    %v1819 = vpack.c.b16 %v1327, %v1326
    %v1820 = vpack.c.b16 %v1329, %v1328
    %v1821 = vpack.c.b16 %v1331, %v1330
    %v1822 = vpack.c.b16 %v1333, %v1332
    %v1823 = vpack.c.b16 %v1335, %v1334
    %v1824 = vpack.c.b16 %v1337, %v1336
    %v1825 = vpack.c.b16 %v1339, %v1338
    %v1826 = vpack.c.b16 %v1341, %v1340
    %v1827 = vpack.c.b16 %v1343, %v1342
    %v1828 = vpack.c.b16 %v1345, %v1344
    %v1829 = vpack.c.b16 %v1347, %v1346
    %v1830 = vpack.c.b16 %v1349, %v1348
    %v1831 = vpack.c.b16 %v1351, %v1350
    %v1832 = vpack.c.b16 %v1353, %v1352
    %v1833 = vpack.c.b16 %v1355, %v1354
    %v1834 = vpack.c.b16 %v1357, %v1356
    %v1835 = vpack.c.b16 %v1359, %v1358
    %v1836 = vpack.c.b16 %v1361, %v1360
    %v1837 = vpack.c.b16 %v1363, %v1362
    %v1838 = vpack.c.b16 %v1365, %v1364
    %v1839 = vpack.c.b16 %v1367, %v1366
    %v1840 = vpack.c.b16 %v1369, %v1368
    %v1841 = vpack.c.b16 %v1371, %v1370
    %v1842 = vpack.c.b16 %v1373, %v1372
    %v1843 = vpack.c.b16 %v1375, %v1374
    %v1844 = vpack.c.b16 %v1377, %v1376
    %v1845 = vpack.c.b16 %v1379, %v1378
    %v1846 = vpack.c.b16 %v1381, %v1380
    %v1847 = vpack.c.b16 %v1383, %v1382
    %v1848 = vpack.c.b16 %v1385, %v1384
    %v1849 = vpack.c.b16 %v1387, %v1386
    %v1850 = vpack.c.b16 %v1389, %v1388
    %v1851 = vpack.c.b16 %v1391, %v1390
    %v1852 = vpack.c.b16 %v1393, %v1392
    %v1853 = vpack.c.b16 %v1395, %v1394
    %v1854 = vpack.c.b16 %v1397, %v1396
    %v1855 = vpack.c.b16 %v1399, %v1398
    %v1856 = vpack.c.b16 %v1401, %v1400
    %v1857 = vpack.c.b16 %v1403, %v1402
    %v1858 = vpack.c.b16 %v1405, %v1404
    %v1859 = vpack.c.b16 %v1407, %v1406
    %v1860 = vpack.c.b16 %v1409, %v1408
    %v1861 = vpack.c.b16 %v1411, %v1410
    %v1862 = vpack.c.b16 %v1413, %v1412
    %v1863 = vpack.c.b16 %v1415, %v1414
    %v1864 = vpack.c.b16 %v1417, %v1416
    %v1865 = vpack.c.b16 %v1419, %v1418
    %v1866 = vpack.c.b16 %v1421, %v1420
    %v1867 = vpack.c.b16 %v1423, %v1422
    %v1868 = vpack.c.b16 %v1425, %v1424
    %v1869 = vpack.c.b16 %v1427, %v1426
    %v1870 = vpack.c.b16 %v1429, %v1428
    %v1871 = vpack.c.b16 %v1431, %v1430
    %v1872 = vpack.c.b16 %v1433, %v1432
    %v1873 = vpack.c.b16 %v1435, %v1434
    %v1874 = vpack.c.b16 %v1437, %v1436
    %v1875 = vpack.c.b16 %v1439, %v1438
    %v1876 = vpack.c.b16 %v1441, %v1440
    %v1877 = vpack.c.b16 %v1443, %v1442
    %v1878 = vpack.c.b16 %v1445, %v1444
    %v1879 = vpack.c.b16 %v1447, %v1446
    %v1880 = vpack.c.b16 %v1449, %v1448
    %v1881 = vpack.c.b16 %v1451, %v1450
    %v1882 = vpack.c.b16 %v1453, %v1452
    %v1883 = vpack.c.b16 %v1455, %v1454
    %v1884 = vpack.c.b16 %v1457, %v1456
    %v1885 = vpack.c.b16 %v1459, %v1458
    %v1886 = vpack.c.b16 %v1461, %v1460
    %v1887 = vpack.c.b16 %v1463, %v1462
    %v1888 = vpack.c.b16 %v1465, %v1464
    %v1889 = vpack.c.b16 %v1467, %v1466
    %v1890 = vpack.c.b16 %v1469, %v1468
    %v1891 = vpack.c.b16 %v1471, %v1470
    %v1892 = vpack.c.b16 %v1473, %v1472
    %v1893 = vpack.c.b16 %v1475, %v1474
    %v1894 = vpack.c.b16 %v1477, %v1476
    %v1895 = vpack.c.b16 %v1479, %v1478
    %v1896 = vpack.c.b16 %v1481, %v1480
    %v1897 = vpack.c.b16 %v1483, %v1482
    %v1898 = vpack.c.b16 %v1485, %v1484
    %v1899 = vpack.c.b16 %v1487, %v1486
    %v1900 = vpack.c.b16 %v1489, %v1488
    %v1901 = vpack.c.b16 %v1491, %v1490
    %v1902 = vpack.c.b16 %v1493, %v1492
    %v1903 = vpack.c.b16 %v1495, %v1494
    %v1904 = vpack.c.b16 %v1497, %v1496
    %v1905 = vpack.c.b16 %v1499, %v1498
    %v1906 = vpack.c.b16 %v1501, %v1500
    %v1907 = vpack.c.b16 %v1503, %v1502
    %v1908 = vpack.c.b16 %v1505, %v1504
    %v1909 = vpack.c.b16 %v1507, %v1506
    %v1910 = vpack.c.b16 %v1509, %v1508
    %v1911 = vpack.c.b16 %v1511, %v1510
    %v1912 = vpack.c.b16 %v1513, %v1512
    %v1913 = vpack.c.b16 %v1515, %v1514
    %v1914 = vpack.c.b16 %v1517, %v1516
    %v1915 = vpack.c.b16 %v1519, %v1518
    %v1916 = vpack.c.b16 %v1521, %v1520
    %v1917 = vpack.c.b16 %v1523, %v1522
    %v1918 = vpack.c.b16 %v1525, %v1524
    %v1919 = vpack.c.b16 %v1527, %v1526
    %v1920 = vpack.c.b16 %v1529, %v1528
    %v1921 = vpack.c.b16 %v1531, %v1530
    %v1922 = vpack.c.b16 %v1533, %v1532
    %v1923 = vpack.c.b16 %v1535, %v1534
    %v1924 = vpack.c.b16 %v1537, %v1536
    %v1925 = vpack.c.b16 %v1539, %v1538
    %v1926 = vpack.c.b16 %v1541, %v1540
    %v1927 = vpack.c.b16 %v1543, %v1542
    %v1928 = vpack.c.b16 %v1545, %v1544
    %v1929 = vpack.c.b16 %v1547, %v1546
    %v1930 = vpack.c.b16 %v1549, %v1548
    %v1931 = vpack.c.b16 %v1551, %v1550
    %v1932 = vpack.c.b16 %v1553, %v1552
    %v1933 = vpack.c.b16 %v1555, %v1554
    %v1934 = vpack.c.b16 %v1557, %v1556
    %v1935 = vpack.c.b16 %v1559, %v1558
    %v1936 = vpack.c.b16 %v1561, %v1560
    %v1937 = vpack.c.b16 %v1563, %v1562
    %v1938 = vpack.c.b16 %v1565, %v1564
    %v1939 = vpack.c.b16 %v1567, %v1566
    %v1940 = vpack.c.b16 %v1569, %v1568
    %v1941 = vpack.c.b16 %v1571, %v1570
    %v1942 = vpack.c.b16 %v1573, %v1572
    %v1943 = vpack.c.b16 %v1575, %v1574
    %v1944 = vpack.c.b16 %v1577, %v1576
    %v1945 = vpack.c.b16 %v1579, %v1578
    %v1946 = vpack.c.b16 %v1581, %v1580
    %v1947 = vpack.c.b16 %v1583, %v1582
    %v1948 = vpack.c.b16 %v1585, %v1584
    %v1949 = vpack.c.b16 %v1587, %v1586
    %v1950 = vpack.c.b16 %v1589, %v1588
    %v1951 = vpack.c.b16 %v1591, %v1590
    %v1952 = vpack.c.b16 %v1593, %v1592
    %v1953 = vpack.c.b16 %v1595, %v1594
    %v1954 = vpack.c.b16 %v1597, %v1596
    %v1955 = vpack.c.b16 %v1599, %v1598
    %v1956 = vpack.c.b16 %v1601, %v1600
    %v1957 = vpack.c.b16 %v1603, %v1602
    %v1958 = vpack.c.b16 %v1605, %v1604
    %v1959 = vpack.c.b16 %v1607, %v1606
    %v1960 = vpack.c.b16 %v1609, %v1608
    %v1961 = vpack.c.b16 %v1611, %v1610
    %v1962 = vpack.c.b16 %v1613, %v1612
    %v1963 = vpack.c.b16 %v1615, %v1614
    %v1964 = vpack.c.b16 %v1617, %v1616
    %v1965 = vpack.c.b16 %v1619, %v1618
    %v1966 = vpack.c.b16 %v1621, %v1620
    %v1967 = vpack.c.b16 %v1623, %v1622
    %v1968 = vpack.c.b16 %v1625, %v1624
    %v1969 = vpack.c.b16 %v1627, %v1626
    %v1970 = vpack.c.b16 %v1629, %v1628
    %v1971 = vpack.c.b16 %v1631, %v1630
    %v1972 = vpack.c.b16 %v1633, %v1632
    %v1973 = vpack.c.b16 %v1635, %v1634
    %v1974 = vpack.c.b16 %v1637, %v1636
    %v1975 = vpack.c.b16 %v1639, %v1638
    %v1976 = vpack.c.b16 %v1641, %v1640
    %v1977 = vpack.c.b16 %v1643, %v1642
    %v1978 = vpack.c.b16 %v1645, %v1644
    %v1979 = vpack.c.b16 %v1647, %v1646
    %v1980 = vpack.c.b16 %v1649, %v1648
    %v1981 = vpack.c.b16 %v1651, %v1650
    %v1982 = vpack.c.b16 %v1653, %v1652
    %v1983 = vpack.c.b16 %v1655, %v1654
    %v1984 = vpack.c.b16 %v1657, %v1656
    %v1985 = vpack.c.b16 %v1659, %v1658
    %v1986 = vpack.c.b16 %v1661, %v1660
    %v1987 = vpack.c.b16 %v1663, %v1662
    %v1988 = vpack.c.b16 %v1665, %v1664
    %v1989 = vpack.c.b16 %v1667, %v1666
    %v1990 = vpack.c.b16 %v1669, %v1668
    %v1991 = vpack.c.b16 %v1671, %v1670
    %v1992 = vpack.c.b16 %v1673, %v1672
    %v1993 = vpack.c.b16 %v1675, %v1674
    %v1994 = vpack.c.b16 %v1677, %v1676
    %v1995 = vpack.c.b16 %v1679, %v1678
    %v1996 = vpack.c.b16 %v1681, %v1680
    %v1997 = vpack.c.b16 %v1683, %v1682
    %v1998 = vpack.c.b16 %v1685, %v1684
    %v1999 = vpack.c.b16 %v1687, %v1686
    %v2000 = vpack.c.b16 %v1689, %v1688
    %v2001 = vpack.c.b16 %v1691, %v1690
    %v2002 = vpack.c.b16 %v1693, %v1692
    %v2003 = vpack.c.b16 %v1695, %v1694
    %v2004 = vpack.c.b16 %v1697, %v1696
    %v2005 = vpack.c.b16 %v1699, %v1698
    %v2006 = vpack.c.b16 %v1701, %v1700
    %v2007 = vpack.c.b16 %v1703, %v1702
    %v2008 = vpack.c.b16 %v1705, %v1704
    %v2009 = vpack.c.b16 %v1707, %v1706
    %v2010 = vpack.c.b16 %v1709, %v1708
    %v2011 = vpack.c.b16 %v1711, %v1710
    %v2012 = vpack.c.b16 %v1713, %v1712
    %v2013 = vpack.c.b16 %v1715, %v1714
    %v2014 = vpack.c.b16 %v1717, %v1716
    %v2015 = vpack.c.b16 %v1719, %v1718
    %v2016 = vpack.c.b16 %v1721, %v1720
    %v2017 = vpack.c.b16 %v1723, %v1722
    %v2018 = vpack.c.b16 %v1725, %v1724
    %v2019 = vpack.c.b16 %v1727, %v1726
    %v2020 = vpack.c.b16 %v1729, %v1728
    %v2021 = vpack.c.b16 %v1731, %v1730
    %v2022 = vpack.c.b16 %v1733, %v1732
    %v2023 = vpack.c.b16 %v1735, %v1734
    %v2024 = vpack.c.b16 %v1737, %v1736
    %v2025 = vpack.c.b16 %v1739, %v1738
    %v2026 = vpack.c.b16 %v1741, %v1740
    %v2027 = vpack.c.b16 %v1743, %v1742
    %v2028 = vpack.c.b16 %v1745, %v1744
    %v2029 = vpack.c.b16 %v1747, %v1746
    %v2030 = vpack.c.b16 %v1749, %v1748
    %v2031 = vpack.c.b16 %v1751, %v1750
    %v2032 = vpack.c.b16 %v1753, %v1752
    %v2033 = vpack.c.b16 %v1755, %v1754
    %v2034 = vpack.c.b16 %v1757, %v1756
    %v2035 = vpack.c.b16 %v1759, %v1758
    %v2036 = vpack.c.b16 %v1761, %v1760
    %v2037 = vpack.c.b16 %v1763, %v1762
    %v2038 = vpack.c.b16 %v1765, %v1764
    %v2039 = vpack.c.b16 %v1767, %v1766
    %v2040 = vpack.c.b16 %v1769, %v1768
    %v2041 = vpack.c.b16 %v1771, %v1770
    %v2042 = vpack.c.b16 %v1773, %v1772
    %v2043 = vpack.c.b16 %v1775, %v1774
    %v2044 = vpack.c.b16 %v1777, %v1776
    %v2045 = vpack.c.b16 %v1779, %v1778
    %v2046 = vpack.c.b16 %v1781, %v1780
    %v2047 = vpack.c.b16 %v1783, %v1782
    %v2048 = vpack.c.b16 %v1785, %v1784
    %v2049 = vpack.c.b16 %v1787, %v1786
    %v2050 = vpack.c.b16 %v1789, %v1788
    %v2051 = vpack.c.b16 %v1791, %v1790
    %v2052 = vpack.c.b16 %v1793, %v1792
    %v2053 = vpack.c.b16 %v1795, %v1794
    %v2054 = vpack.c.b16 %v1797, %v1796
    %v2055 = vpack.c.b16 %v1799, %v1798
    %2312 = vmatprep.subr.bf16.mxu0 0
    %2313 = vmatpush1.bf16.msra.mxu0 %v1800
    %2314 = vmatprep.subr.bf16.mxu0 0
    %2315 = vmatpush1.bf16.msra.mxu0 %v1801
    %2316 = vmatprep.subr.bf16.mxu0 0
    %2317 = vmatpush1.bf16.msra.mxu0 %v1802
    %2318 = vmatprep.subr.bf16.mxu0 0
    %2319 = vmatpush1.bf16.msra.mxu0 %v1803
    %2320 = vmatprep.subr.bf16.mxu0 0
    %2321 = vmatpush1.bf16.msra.mxu0 %v1804
    %2322 = vmatprep.subr.bf16.mxu0 0
    %2323 = vmatpush1.bf16.msra.mxu0 %v1805
    %2324 = vmatprep.subr.bf16.mxu0 0
    %2325 = vmatpush1.bf16.msra.mxu0 %v1806
    %2326 = vmatprep.subr.bf16.mxu0 0
    %2327 = vmatpush1.bf16.msra.mxu0 %v1807
    %2328 = vmatprep.subr.bf16.mxu0 0
    %2329 = vmatpush1.bf16.msra.mxu0 %v1808
    %2330 = vmatprep.subr.bf16.mxu0 0
    %2331 = vmatpush1.bf16.msra.mxu0 %v1809
    %2332 = vmatprep.subr.bf16.mxu0 0
    %2333 = vmatpush1.bf16.msra.mxu0 %v1810
    %2334 = vmatprep.subr.bf16.mxu0 0
    %2335 = vmatpush1.bf16.msra.mxu0 %v1811
    %2336 = vmatprep.subr.bf16.mxu0 0
    %2337 = vmatpush1.bf16.msra.mxu0 %v1812
    %2338 = vmatprep.subr.bf16.mxu0 0
    %2339 = vmatpush1.bf16.msra.mxu0 %v1813
    %2340 = vmatprep.subr.bf16.mxu0 0
    %2341 = vmatpush1.bf16.msra.mxu0 %v1814
    %2342 = vmatprep.subr.bf16.mxu0 0
    %2343 = vmatpush1.bf16.msra.mxu0 %v1815
    %2344 = vmatprep.mubr.bf16.mxu0 %v226
    %2345 = vmatmul.mubr.bf16.gmra.mrb[0].mxu0 %v225
    %v2346 = vpop.f32.mrb[0].mxu0
    %v2347 = vadd.f32 %v774, %v2346
    %v2348 = vpop.f32.mrb[0].mxu0
    %v2349 = vpop.f32.mrb[0].mxu0
    %v2350 = vpop.f32.mrb[0].mxu0
    %2351 = vdwg.mxu0
    %2352 = vmatprep.subr.bf16.mxu0 0
    %2353 = vmatpush1.bf16.msra.mxu0 %v1816
    %2354 = vmatprep.subr.bf16.mxu0 0
    %2355 = vmatpush1.bf16.msra.mxu0 %v1817
    %2356 = vmatprep.subr.bf16.mxu0 0
    %2357 = vmatpush1.bf16.msra.mxu0 %v1818
    %2358 = vmatprep.subr.bf16.mxu0 0
    %2359 = vmatpush1.bf16.msra.mxu0 %v1819
    %2360 = vmatprep.subr.bf16.mxu0 0
    %2361 = vmatpush1.bf16.msra.mxu0 %v1820
    %2362 = vmatprep.subr.bf16.mxu0 0
    %2363 = vmatpush1.bf16.msra.mxu0 %v1821
    %2364 = vmatprep.subr.bf16.mxu0 0
    %2365 = vmatpush1.bf16.msra.mxu0 %v1822
    %2366 = vmatprep.subr.bf16.mxu0 0
    %2367 = vmatpush1.bf16.msra.mxu0 %v1823
    %2368 = vmatprep.subr.bf16.mxu0 0
    %2369 = vmatpush1.bf16.msra.mxu0 %v1824
    %2370 = vmatprep.subr.bf16.mxu0 0
    %2371 = vmatpush1.bf16.msra.mxu0 %v1825
    %2372 = vmatprep.subr.bf16.mxu0 0
    %2373 = vmatpush1.bf16.msra.mxu0 %v1826
    %2374 = vmatprep.subr.bf16.mxu0 0
    %2375 = vmatpush1.bf16.msra.mxu0 %v1827
    %2376 = vmatprep.subr.bf16.mxu0 0
    %2377 = vmatpush1.bf16.msra.mxu0 %v1828
    %2378 = vmatprep.subr.bf16.mxu0 0
    %2379 = vmatpush1.bf16.msra.mxu0 %v1829
    %2380 = vmatprep.subr.bf16.mxu0 0
    %2381 = vmatpush1.bf16.msra.mxu0 %v1830
    %2382 = vmatprep.subr.bf16.mxu0 0
    %2383 = vmatpush1.bf16.msra.mxu0 %v1831
    %2384 = vmatprep.mubr.bf16.mxu0 %v228
    %2385 = vmatmul.mubr.bf16.gmra.mrb[0].mxu0 %v227
    %v2386 = vpop.f32.mrb[0].mxu0
    %v2387 = vadd.f32 %v2347, %v2386
    %v2388 = vpop.f32.mrb[0].mxu0
    %v2389 = vpop.f32.mrb[0].mxu0
    %v2390 = vpop.f32.mrb[0].mxu0
    %2391 = vdwg.mxu0
    %2392 = vmatprep.subr.bf16.mxu0 0
    %2393 = vmatpush1.bf16.msra.mxu0 %v1832
    %2394 = vmatprep.subr.bf16.mxu0 0
    %2395 = vmatpush1.bf16.msra.mxu0 %v1833
    %2396 = vmatprep.subr.bf16.mxu0 0
    %2397 = vmatpush1.bf16.msra.mxu0 %v1834
    %2398 = vmatprep.subr.bf16.mxu0 0
    %2399 = vmatpush1.bf16.msra.mxu0 %v1835
    %2400 = vmatprep.subr.bf16.mxu0 0
    %2401 = vmatpush1.bf16.msra.mxu0 %v1836
    %2402 = vmatprep.subr.bf16.mxu0 0
    %2403 = vmatpush1.bf16.msra.mxu0 %v1837
    %2404 = vmatprep.subr.bf16.mxu0 0
    %2405 = vmatpush1.bf16.msra.mxu0 %v1838
    %2406 = vmatprep.subr.bf16.mxu0 0
    %2407 = vmatpush1.bf16.msra.mxu0 %v1839
    %2408 = vmatprep.subr.bf16.mxu0 0
    %2409 = vmatpush1.bf16.msra.mxu0 %v1840
    %2410 = vmatprep.subr.bf16.mxu0 0
    %2411 = vmatpush1.bf16.msra.mxu0 %v1841
    %2412 = vmatprep.subr.bf16.mxu0 0
    %2413 = vmatpush1.bf16.msra.mxu0 %v1842
    %2414 = vmatprep.subr.bf16.mxu0 0
    %2415 = vmatpush1.bf16.msra.mxu0 %v1843
    %2416 = vmatprep.subr.bf16.mxu0 0
    %2417 = vmatpush1.bf16.msra.mxu0 %v1844
    %2418 = vmatprep.subr.bf16.mxu0 0
    %2419 = vmatpush1.bf16.msra.mxu0 %v1845
    %2420 = vmatprep.subr.bf16.mxu0 0
    %2421 = vmatpush1.bf16.msra.mxu0 %v1846
    %2422 = vmatprep.subr.bf16.mxu0 0
    %2423 = vmatpush1.bf16.msra.mxu0 %v1847
    %2424 = vmatprep.mubr.bf16.mxu0 %v230
    %2425 = vmatmul.mubr.bf16.gmra.mrb[0].mxu0 %v229
    %v2426 = vpop.f32.mrb[0].mxu0
    %v2427 = vadd.f32 %v2387, %v2426
    %v2428 = vpop.f32.mrb[0].mxu0
    %v2429 = vpop.f32.mrb[0].mxu0
    %v2430 = vpop.f32.mrb[0].mxu0
    %2431 = vdwg.mxu0
    %2432 = vmatprep.subr.bf16.mxu0 0
    %2433 = vmatpush1.bf16.msra.mxu0 %v1848
    %2434 = vmatprep.subr.bf16.mxu0 0
    %2435 = vmatpush1.bf16.msra.mxu0 %v1849
    %2436 = vmatprep.subr.bf16.mxu0 0
    %2437 = vmatpush1.bf16.msra.mxu0 %v1850
    %2438 = vmatprep.subr.bf16.mxu0 0
    %2439 = vmatpush1.bf16.msra.mxu0 %v1851
    %2440 = vmatprep.subr.bf16.mxu0 0
    %2441 = vmatpush1.bf16.msra.mxu0 %v1852
    %2442 = vmatprep.subr.bf16.mxu0 0
    %2443 = vmatpush1.bf16.msra.mxu0 %v1853
    %2444 = vmatprep.subr.bf16.mxu0 0
    %2445 = vmatpush1.bf16.msra.mxu0 %v1854
    %2446 = vmatprep.subr.bf16.mxu0 0
    %2447 = vmatpush1.bf16.msra.mxu0 %v1855
    %2448 = vmatprep.subr.bf16.mxu0 0
    %2449 = vmatpush1.bf16.msra.mxu0 %v1856
    %2450 = vmatprep.subr.bf16.mxu0 0
    %2451 = vmatpush1.bf16.msra.mxu0 %v1857
    %2452 = vmatprep.subr.bf16.mxu0 0
    %2453 = vmatpush1.bf16.msra.mxu0 %v1858
    %2454 = vmatprep.subr.bf16.mxu0 0
    %2455 = vmatpush1.bf16.msra.mxu0 %v1859
    %2456 = vmatprep.subr.bf16.mxu0 0
    %2457 = vmatpush1.bf16.msra.mxu0 %v1860
    %2458 = vmatprep.subr.bf16.mxu0 0
    %2459 = vmatpush1.bf16.msra.mxu0 %v1861
    %2460 = vmatprep.subr.bf16.mxu0 0
    %2461 = vmatpush1.bf16.msra.mxu0 %v1862
    %2462 = vmatprep.subr.bf16.mxu0 0
    %2463 = vmatpush1.bf16.msra.mxu0 %v1863
    %2464 = vmatprep.mubr.bf16.mxu0 %v232
    %2465 = vmatmul.mubr.bf16.gmra.mrb[0].mxu0 %v231
    %v2466 = vpop.f32.mrb[0].mxu0
    %v2467 = vadd.f32 %v2427, %v2466
    %v2468 = vpop.f32.mrb[0].mxu0
    %v2469 = vpop.f32.mrb[0].mxu0
    %v2470 = vpop.f32.mrb[0].mxu0
    %2471 = vdwg.mxu0
    %2472 = vmatprep.subr.bf16.mxu0 0
    %2473 = vmatpush1.bf16.msra.mxu0 %v1864
    %2474 = vmatprep.subr.bf16.mxu0 0
    %2475 = vmatpush1.bf16.msra.mxu0 %v1865
    %2476 = vmatprep.subr.bf16.mxu0 0
    %2477 = vmatpush1.bf16.msra.mxu0 %v1866
    %2478 = vmatprep.subr.bf16.mxu0 0
    %2479 = vmatpush1.bf16.msra.mxu0 %v1867
    %2480 = vmatprep.subr.bf16.mxu0 0
    %2481 = vmatpush1.bf16.msra.mxu0 %v1868
    %2482 = vmatprep.subr.bf16.mxu0 0
    %2483 = vmatpush1.bf16.msra.mxu0 %v1869
    %2484 = vmatprep.subr.bf16.mxu0 0
    %2485 = vmatpush1.bf16.msra.mxu0 %v1870
    %2486 = vmatprep.subr.bf16.mxu0 0
    %2487 = vmatpush1.bf16.msra.mxu0 %v1871
    %2488 = vmatprep.subr.bf16.mxu0 0
    %2489 = vmatpush1.bf16.msra.mxu0 %v1872
    %2490 = vmatprep.subr.bf16.mxu0 0
    %2491 = vmatpush1.bf16.msra.mxu0 %v1873
    %2492 = vmatprep.subr.bf16.mxu0 0
    %2493 = vmatpush1.bf16.msra.mxu0 %v1874
    %2494 = vmatprep.subr.bf16.mxu0 0
    %2495 = vmatpush1.bf16.msra.mxu0 %v1875
    %2496 = vmatprep.subr.bf16.mxu0 0
    %2497 = vmatpush1.bf16.msra.mxu0 %v1876
    %2498 = vmatprep.subr.bf16.mxu0 0
    %2499 = vmatpush1.bf16.msra.mxu0 %v1877
    %2500 = vmatprep.subr.bf16.mxu0 0
    %2501 = vmatpush1.bf16.msra.mxu0 %v1878
    %2502 = vmatprep.subr.bf16.mxu0 0
    %2503 = vmatpush1.bf16.msra.mxu0 %v1879
    %2504 = vmatprep.mubr.bf16.mxu0 %v234
    %2505 = vmatmul.mubr.bf16.gmra.mrb[0].mxu0 %v233
    %v2506 = vpop.f32.mrb[0].mxu0
    %v2507 = vadd.f32 %v2467, %v2506
    %v2508 = vpop.f32.mrb[0].mxu0
    %v2509 = vpop.f32.mrb[0].mxu0
    %v2510 = vpop.f32.mrb[0].mxu0
    %2511 = vdwg.mxu0
    %2512 = vmatprep.subr.bf16.mxu0 0
    %2513 = vmatpush1.bf16.msra.mxu0 %v1880
    %2514 = vmatprep.subr.bf16.mxu0 0
    %2515 = vmatpush1.bf16.msra.mxu0 %v1881
    %2516 = vmatprep.subr.bf16.mxu0 0
    %2517 = vmatpush1.bf16.msra.mxu0 %v1882
    %2518 = vmatprep.subr.bf16.mxu0 0
    %2519 = vmatpush1.bf16.msra.mxu0 %v1883
    %2520 = vmatprep.subr.bf16.mxu0 0
    %2521 = vmatpush1.bf16.msra.mxu0 %v1884
    %2522 = vmatprep.subr.bf16.mxu0 0
    %2523 = vmatpush1.bf16.msra.mxu0 %v1885
    %2524 = vmatprep.subr.bf16.mxu0 0
    %2525 = vmatpush1.bf16.msra.mxu0 %v1886
    %2526 = vmatprep.subr.bf16.mxu0 0
    %2527 = vmatpush1.bf16.msra.mxu0 %v1887
    %2528 = vmatprep.subr.bf16.mxu0 0
    %2529 = vmatpush1.bf16.msra.mxu0 %v1888
    %2530 = vmatprep.subr.bf16.mxu0 0
    %2531 = vmatpush1.bf16.msra.mxu0 %v1889
    %2532 = vmatprep.subr.bf16.mxu0 0
    %2533 = vmatpush1.bf16.msra.mxu0 %v1890
    %2534 = vmatprep.subr.bf16.mxu0 0
    %2535 = vmatpush1.bf16.msra.mxu0 %v1891
    %2536 = vmatprep.subr.bf16.mxu0 0
    %2537 = vmatpush1.bf16.msra.mxu0 %v1892
    %2538 = vmatprep.subr.bf16.mxu0 0
    %2539 = vmatpush1.bf16.msra.mxu0 %v1893
    %2540 = vmatprep.subr.bf16.mxu0 0
    %2541 = vmatpush1.bf16.msra.mxu0 %v1894
    %2542 = vmatprep.subr.bf16.mxu0 0
    %2543 = vmatpush1.bf16.msra.mxu0 %v1895
    %2544 = vmatprep.mubr.bf16.mxu0 %v236
    %2545 = vmatmul.mubr.bf16.gmra.mrb[0].mxu0 %v235
    %v2546 = vpop.f32.mrb[0].mxu0
    %v2547 = vadd.f32 %v2507, %v2546
    %v2548 = vpop.f32.mrb[0].mxu0
    %v2549 = vpop.f32.mrb[0].mxu0
    %v2550 = vpop.f32.mrb[0].mxu0
    %2551 = vdwg.mxu0
    %2552 = vmatprep.subr.bf16.mxu0 0
    %2553 = vmatpush1.bf16.msra.mxu0 %v1896
    %2554 = vmatprep.subr.bf16.mxu0 0
    %2555 = vmatpush1.bf16.msra.mxu0 %v1897
    %2556 = vmatprep.subr.bf16.mxu0 0
    %2557 = vmatpush1.bf16.msra.mxu0 %v1898
    %2558 = vmatprep.subr.bf16.mxu0 0
    %2559 = vmatpush1.bf16.msra.mxu0 %v1899
    %2560 = vmatprep.subr.bf16.mxu0 0
    %2561 = vmatpush1.bf16.msra.mxu0 %v1900
    %2562 = vmatprep.subr.bf16.mxu0 0
    %2563 = vmatpush1.bf16.msra.mxu0 %v1901
    %2564 = vmatprep.subr.bf16.mxu0 0
    %2565 = vmatpush1.bf16.msra.mxu0 %v1902
    %2566 = vmatprep.subr.bf16.mxu0 0
    %2567 = vmatpush1.bf16.msra.mxu0 %v1903
    %2568 = vmatprep.subr.bf16.mxu0 0
    %2569 = vmatpush1.bf16.msra.mxu0 %v1904
    %2570 = vmatprep.subr.bf16.mxu0 0
    %2571 = vmatpush1.bf16.msra.mxu0 %v1905
    %2572 = vmatprep.subr.bf16.mxu0 0
    %2573 = vmatpush1.bf16.msra.mxu0 %v1906
    %2574 = vmatprep.subr.bf16.mxu0 0
    %2575 = vmatpush1.bf16.msra.mxu0 %v1907
    %2576 = vmatprep.subr.bf16.mxu0 0
    %2577 = vmatpush1.bf16.msra.mxu0 %v1908
    %2578 = vmatprep.subr.bf16.mxu0 0
    %2579 = vmatpush1.bf16.msra.mxu0 %v1909
    %2580 = vmatprep.subr.bf16.mxu0 0
    %2581 = vmatpush1.bf16.msra.mxu0 %v1910
    %2582 = vmatprep.subr.bf16.mxu0 0
    %2583 = vmatpush1.bf16.msra.mxu0 %v1911
    %2584 = vmatprep.mubr.bf16.mxu0 %v238
    %2585 = vmatmul.mubr.bf16.gmra.mrb[0].mxu0 %v237
    %v2586 = vpop.f32.mrb[0].mxu0
    %v2587 = vadd.f32 %v2547, %v2586
    %v2588 = vpop.f32.mrb[0].mxu0
    %v2589 = vpop.f32.mrb[0].mxu0
    %v2590 = vpop.f32.mrb[0].mxu0
    %2591 = vdwg.mxu0
    %2592 = vmatprep.subr.bf16.mxu0 0
    %2593 = vmatpush1.bf16.msra.mxu0 %v1912
    %2594 = vmatprep.subr.bf16.mxu0 0
    %2595 = vmatpush1.bf16.msra.mxu0 %v1913
    %2596 = vmatprep.subr.bf16.mxu0 0
    %2597 = vmatpush1.bf16.msra.mxu0 %v1914
    %2598 = vmatprep.subr.bf16.mxu0 0
    %2599 = vmatpush1.bf16.msra.mxu0 %v1915
    %2600 = vmatprep.subr.bf16.mxu0 0
    %2601 = vmatpush1.bf16.msra.mxu0 %v1916
    %2602 = vmatprep.subr.bf16.mxu0 0
    %2603 = vmatpush1.bf16.msra.mxu0 %v1917
    %2604 = vmatprep.subr.bf16.mxu0 0
    %2605 = vmatpush1.bf16.msra.mxu0 %v1918
    %2606 = vmatprep.subr.bf16.mxu0 0
    %2607 = vmatpush1.bf16.msra.mxu0 %v1919
    %2608 = vmatprep.subr.bf16.mxu0 0
    %2609 = vmatpush1.bf16.msra.mxu0 %v1920
    %2610 = vmatprep.subr.bf16.mxu0 0
    %2611 = vmatpush1.bf16.msra.mxu0 %v1921
    %2612 = vmatprep.subr.bf16.mxu0 0
    %2613 = vmatpush1.bf16.msra.mxu0 %v1922
    %2614 = vmatprep.subr.bf16.mxu0 0
    %2615 = vmatpush1.bf16.msra.mxu0 %v1923
    %2616 = vmatprep.subr.bf16.mxu0 0
    %2617 = vmatpush1.bf16.msra.mxu0 %v1924
    %2618 = vmatprep.subr.bf16.mxu0 0
    %2619 = vmatpush1.bf16.msra.mxu0 %v1925
    %2620 = vmatprep.subr.bf16.mxu0 0
    %2621 = vmatpush1.bf16.msra.mxu0 %v1926
    %2622 = vmatprep.subr.bf16.mxu0 0
    %2623 = vmatpush1.bf16.msra.mxu0 %v1927
    %2624 = vmatprep.mubr.bf16.mxu0 %v240
    %2625 = vmatmul.mubr.bf16.gmra.mrb[0].mxu0 %v239
    %v2626 = vpop.f32.mrb[0].mxu0
    %v2627 = vadd.f32 %v2587, %v2626
    %v2628 = vpop.f32.mrb[0].mxu0
    %v2629 = vpop.f32.mrb[0].mxu0
    %v2630 = vpop.f32.mrb[0].mxu0
    %2631 = vdwg.mxu0
    %2632 = vmatprep.subr.bf16.mxu0 0
    %2633 = vmatpush1.bf16.msra.mxu0 %v1928
    %2634 = vmatprep.subr.bf16.mxu0 0
    %2635 = vmatpush1.bf16.msra.mxu0 %v1929
    %2636 = vmatprep.subr.bf16.mxu0 0
    %2637 = vmatpush1.bf16.msra.mxu0 %v1930
    %2638 = vmatprep.subr.bf16.mxu0 0
    %2639 = vmatpush1.bf16.msra.mxu0 %v1931
    %2640 = vmatprep.subr.bf16.mxu0 0
    %2641 = vmatpush1.bf16.msra.mxu0 %v1932
    %2642 = vmatprep.subr.bf16.mxu0 0
    %2643 = vmatpush1.bf16.msra.mxu0 %v1933
    %2644 = vmatprep.subr.bf16.mxu0 0
    %2645 = vmatpush1.bf16.msra.mxu0 %v1934
    %2646 = vmatprep.subr.bf16.mxu0 0
    %2647 = vmatpush1.bf16.msra.mxu0 %v1935
    %2648 = vmatprep.subr.bf16.mxu0 0
    %2649 = vmatpush1.bf16.msra.mxu0 %v1936
    %2650 = vmatprep.subr.bf16.mxu0 0
    %2651 = vmatpush1.bf16.msra.mxu0 %v1937
    %2652 = vmatprep.subr.bf16.mxu0 0
    %2653 = vmatpush1.bf16.msra.mxu0 %v1938
    %2654 = vmatprep.subr.bf16.mxu0 0
    %2655 = vmatpush1.bf16.msra.mxu0 %v1939
    %2656 = vmatprep.subr.bf16.mxu0 0
    %2657 = vmatpush1.bf16.msra.mxu0 %v1940
    %2658 = vmatprep.subr.bf16.mxu0 0
    %2659 = vmatpush1.bf16.msra.mxu0 %v1941
    %2660 = vmatprep.subr.bf16.mxu0 0
    %2661 = vmatpush1.bf16.msra.mxu0 %v1942
    %2662 = vmatprep.subr.bf16.mxu0 0
    %2663 = vmatpush1.bf16.msra.mxu0 %v1943
    %2664 = vmatprep.mubr.bf16.mxu0 %v242
    %2665 = vmatmul.mubr.bf16.gmra.mrb[0].mxu0 %v241
    %v2666 = vpop.f32.mrb[0].mxu0
    %v2667 = vadd.f32 %v2627, %v2666
    %v2668 = vpop.f32.mrb[0].mxu0
    %v2669 = vpop.f32.mrb[0].mxu0
    %v2670 = vpop.f32.mrb[0].mxu0
    %2671 = vdwg.mxu0
    %2672 = vmatprep.subr.bf16.mxu0 0
    %2673 = vmatpush1.bf16.msra.mxu0 %v1944
    %2674 = vmatprep.subr.bf16.mxu0 0
    %2675 = vmatpush1.bf16.msra.mxu0 %v1945
    %2676 = vmatprep.subr.bf16.mxu0 0
    %2677 = vmatpush1.bf16.msra.mxu0 %v1946
    %2678 = vmatprep.subr.bf16.mxu0 0
    %2679 = vmatpush1.bf16.msra.mxu0 %v1947
    %2680 = vmatprep.subr.bf16.mxu0 0
    %2681 = vmatpush1.bf16.msra.mxu0 %v1948
    %2682 = vmatprep.subr.bf16.mxu0 0
    %2683 = vmatpush1.bf16.msra.mxu0 %v1949
    %2684 = vmatprep.subr.bf16.mxu0 0
    %2685 = vmatpush1.bf16.msra.mxu0 %v1950
    %2686 = vmatprep.subr.bf16.mxu0 0
    %2687 = vmatpush1.bf16.msra.mxu0 %v1951
    %2688 = vmatprep.subr.bf16.mxu0 0
    %2689 = vmatpush1.bf16.msra.mxu0 %v1952
    %2690 = vmatprep.subr.bf16.mxu0 0
    %2691 = vmatpush1.bf16.msra.mxu0 %v1953
    %2692 = vmatprep.subr.bf16.mxu0 0
    %2693 = vmatpush1.bf16.msra.mxu0 %v1954
    %2694 = vmatprep.subr.bf16.mxu0 0
    %2695 = vmatpush1.bf16.msra.mxu0 %v1955
    %2696 = vmatprep.subr.bf16.mxu0 0
    %2697 = vmatpush1.bf16.msra.mxu0 %v1956
    %2698 = vmatprep.subr.bf16.mxu0 0
    %2699 = vmatpush1.bf16.msra.mxu0 %v1957
    %2700 = vmatprep.subr.bf16.mxu0 0
    %2701 = vmatpush1.bf16.msra.mxu0 %v1958
    %2702 = vmatprep.subr.bf16.mxu0 0
    %2703 = vmatpush1.bf16.msra.mxu0 %v1959
    %2704 = vmatprep.mubr.bf16.mxu0 %v244
    %2705 = vmatmul.mubr.bf16.gmra.mrb[0].mxu0 %v243
    %v2706 = vpop.f32.mrb[0].mxu0
    %v2707 = vadd.f32 %v2667, %v2706
    %v2708 = vpop.f32.mrb[0].mxu0
    %v2709 = vpop.f32.mrb[0].mxu0
    %v2710 = vpop.f32.mrb[0].mxu0
    %2711 = vdwg.mxu0
    %2712 = vmatprep.subr.bf16.mxu0 0
    %2713 = vmatpush1.bf16.msra.mxu0 %v1960
    %2714 = vmatprep.subr.bf16.mxu0 0
    %2715 = vmatpush1.bf16.msra.mxu0 %v1961
    %2716 = vmatprep.subr.bf16.mxu0 0
    %2717 = vmatpush1.bf16.msra.mxu0 %v1962
    %2718 = vmatprep.subr.bf16.mxu0 0
    %2719 = vmatpush1.bf16.msra.mxu0 %v1963
    %2720 = vmatprep.subr.bf16.mxu0 0
    %2721 = vmatpush1.bf16.msra.mxu0 %v1964
    %2722 = vmatprep.subr.bf16.mxu0 0
    %2723 = vmatpush1.bf16.msra.mxu0 %v1965
    %2724 = vmatprep.subr.bf16.mxu0 0
    %2725 = vmatpush1.bf16.msra.mxu0 %v1966
    %2726 = vmatprep.subr.bf16.mxu0 0
    %2727 = vmatpush1.bf16.msra.mxu0 %v1967
    %2728 = vmatprep.subr.bf16.mxu0 0
    %2729 = vmatpush1.bf16.msra.mxu0 %v1968
    %2730 = vmatprep.subr.bf16.mxu0 0
    %2731 = vmatpush1.bf16.msra.mxu0 %v1969
    %2732 = vmatprep.subr.bf16.mxu0 0
    %2733 = vmatpush1.bf16.msra.mxu0 %v1970
    %2734 = vmatprep.subr.bf16.mxu0 0
    %2735 = vmatpush1.bf16.msra.mxu0 %v1971
    %2736 = vmatprep.subr.bf16.mxu0 0
    %2737 = vmatpush1.bf16.msra.mxu0 %v1972
    %2738 = vmatprep.subr.bf16.mxu0 0
    %2739 = vmatpush1.bf16.msra.mxu0 %v1973
    %2740 = vmatprep.subr.bf16.mxu0 0
    %2741 = vmatpush1.bf16.msra.mxu0 %v1974
    %2742 = vmatprep.subr.bf16.mxu0 0
    %2743 = vmatpush1.bf16.msra.mxu0 %v1975
    %2744 = vmatprep.mubr.bf16.mxu0 %v246
    %2745 = vmatmul.mubr.bf16.gmra.mrb[0].mxu0 %v245
    %v2746 = vpop.f32.mrb[0].mxu0
    %v2747 = vadd.f32 %v2707, %v2746
    %v2748 = vpop.f32.mrb[0].mxu0
    %v2749 = vpop.f32.mrb[0].mxu0
    %v2750 = vpop.f32.mrb[0].mxu0
    %2751 = vdwg.mxu0
    %2752 = vmatprep.subr.bf16.mxu0 0
    %2753 = vmatpush1.bf16.msra.mxu0 %v1976
    %2754 = vmatprep.subr.bf16.mxu0 0
    %2755 = vmatpush1.bf16.msra.mxu0 %v1977
    %2756 = vmatprep.subr.bf16.mxu0 0
    %2757 = vmatpush1.bf16.msra.mxu0 %v1978
    %2758 = vmatprep.subr.bf16.mxu0 0
    %2759 = vmatpush1.bf16.msra.mxu0 %v1979
    %2760 = vmatprep.subr.bf16.mxu0 0
    %2761 = vmatpush1.bf16.msra.mxu0 %v1980
    %2762 = vmatprep.subr.bf16.mxu0 0
    %2763 = vmatpush1.bf16.msra.mxu0 %v1981
    %2764 = vmatprep.subr.bf16.mxu0 0
    %2765 = vmatpush1.bf16.msra.mxu0 %v1982
    %2766 = vmatprep.subr.bf16.mxu0 0
    %2767 = vmatpush1.bf16.msra.mxu0 %v1983
    %2768 = vmatprep.subr.bf16.mxu0 0
    %2769 = vmatpush1.bf16.msra.mxu0 %v1984
    %2770 = vmatprep.subr.bf16.mxu0 0
    %2771 = vmatpush1.bf16.msra.mxu0 %v1985
    %2772 = vmatprep.subr.bf16.mxu0 0
    %2773 = vmatpush1.bf16.msra.mxu0 %v1986
    %2774 = vmatprep.subr.bf16.mxu0 0
    %2775 = vmatpush1.bf16.msra.mxu0 %v1987
    %2776 = vmatprep.subr.bf16.mxu0 0
    %2777 = vmatpush1.bf16.msra.mxu0 %v1988
    %2778 = vmatprep.subr.bf16.mxu0 0
    %2779 = vmatpush1.bf16.msra.mxu0 %v1989
    %2780 = vmatprep.subr.bf16.mxu0 0
    %2781 = vmatpush1.bf16.msra.mxu0 %v1990
    %2782 = vmatprep.subr.bf16.mxu0 0
    %2783 = vmatpush1.bf16.msra.mxu0 %v1991
    %2784 = vmatprep.mubr.bf16.mxu0 %v248
    %2785 = vmatmul.mubr.bf16.gmra.mrb[0].mxu0 %v247
    %v2786 = vpop.f32.mrb[0].mxu0
    %v2787 = vadd.f32 %v2747, %v2786
    %v2788 = vpop.f32.mrb[0].mxu0
    %v2789 = vpop.f32.mrb[0].mxu0
    %v2790 = vpop.f32.mrb[0].mxu0
    %2791 = vdwg.mxu0
    %2792 = vmatprep.subr.bf16.mxu0 0
    %2793 = vmatpush1.bf16.msra.mxu0 %v1992
    %2794 = vmatprep.subr.bf16.mxu0 0
    %2795 = vmatpush1.bf16.msra.mxu0 %v1993
    %2796 = vmatprep.subr.bf16.mxu0 0
    %2797 = vmatpush1.bf16.msra.mxu0 %v1994
    %2798 = vmatprep.subr.bf16.mxu0 0
    %2799 = vmatpush1.bf16.msra.mxu0 %v1995
    %2800 = vmatprep.subr.bf16.mxu0 0
    %2801 = vmatpush1.bf16.msra.mxu0 %v1996
    %2802 = vmatprep.subr.bf16.mxu0 0
    %2803 = vmatpush1.bf16.msra.mxu0 %v1997
    %2804 = vmatprep.subr.bf16.mxu0 0
    %2805 = vmatpush1.bf16.msra.mxu0 %v1998
    %2806 = vmatprep.subr.bf16.mxu0 0
    %2807 = vmatpush1.bf16.msra.mxu0 %v1999
    %2808 = vmatprep.subr.bf16.mxu0 0
    %2809 = vmatpush1.bf16.msra.mxu0 %v2000
    %2810 = vmatprep.subr.bf16.mxu0 0
    %2811 = vmatpush1.bf16.msra.mxu0 %v2001
    %2812 = vmatprep.subr.bf16.mxu0 0
    %2813 = vmatpush1.bf16.msra.mxu0 %v2002
    %2814 = vmatprep.subr.bf16.mxu0 0
    %2815 = vmatpush1.bf16.msra.mxu0 %v2003
    %2816 = vmatprep.subr.bf16.mxu0 0
    %2817 = vmatpush1.bf16.msra.mxu0 %v2004
    %2818 = vmatprep.subr.bf16.mxu0 0
    %2819 = vmatpush1.bf16.msra.mxu0 %v2005
    %2820 = vmatprep.subr.bf16.mxu0 0
    %2821 = vmatpush1.bf16.msra.mxu0 %v2006
    %2822 = vmatprep.subr.bf16.mxu0 0
    %2823 = vmatpush1.bf16.msra.mxu0 %v2007
    %2824 = vmatprep.mubr.bf16.mxu0 %v250
    %2825 = vmatmul.mubr.bf16.gmra.mrb[0].mxu0 %v249
    %v2826 = vpop.f32.mrb[0].mxu0
    %v2827 = vadd.f32 %v2787, %v2826
    %v2828 = vpop.f32.mrb[0].mxu0
    %v2829 = vpop.f32.mrb[0].mxu0
    %v2830 = vpop.f32.mrb[0].mxu0
    %2831 = vdwg.mxu0
    %2832 = vmatprep.subr.bf16.mxu0 0
    %2833 = vmatpush1.bf16.msra.mxu0 %v2008
    %2834 = vmatprep.subr.bf16.mxu0 0
    %2835 = vmatpush1.bf16.msra.mxu0 %v2009
    %2836 = vmatprep.subr.bf16.mxu0 0
    %2837 = vmatpush1.bf16.msra.mxu0 %v2010
    %2838 = vmatprep.subr.bf16.mxu0 0
    %2839 = vmatpush1.bf16.msra.mxu0 %v2011
    %2840 = vmatprep.subr.bf16.mxu0 0
    %2841 = vmatpush1.bf16.msra.mxu0 %v2012
    %2842 = vmatprep.subr.bf16.mxu0 0
    %2843 = vmatpush1.bf16.msra.mxu0 %v2013
    %2844 = vmatprep.subr.bf16.mxu0 0
    %2845 = vmatpush1.bf16.msra.mxu0 %v2014
    %2846 = vmatprep.subr.bf16.mxu0 0
    %2847 = vmatpush1.bf16.msra.mxu0 %v2015
    %2848 = vmatprep.subr.bf16.mxu0 0
    %2849 = vmatpush1.bf16.msra.mxu0 %v2016
    %2850 = vmatprep.subr.bf16.mxu0 0
    %2851 = vmatpush1.bf16.msra.mxu0 %v2017
    %2852 = vmatprep.subr.bf16.mxu0 0
    %2853 = vmatpush1.bf16.msra.mxu0 %v2018
    %2854 = vmatprep.subr.bf16.mxu0 0
    %2855 = vmatpush1.bf16.msra.mxu0 %v2019
    %2856 = vmatprep.subr.bf16.mxu0 0
    %2857 = vmatpush1.bf16.msra.mxu0 %v2020
    %2858 = vmatprep.subr.bf16.mxu0 0
    %2859 = vmatpush1.bf16.msra.mxu0 %v2021
    %2860 = vmatprep.subr.bf16.mxu0 0
    %2861 = vmatpush1.bf16.msra.mxu0 %v2022
    %2862 = vmatprep.subr.bf16.mxu0 0
    %2863 = vmatpush1.bf16.msra.mxu0 %v2023
    %2864 = vmatprep.mubr.bf16.mxu0 %v252
    %2865 = vmatmul.mubr.bf16.gmra.mrb[0].mxu0 %v251
    %v2866 = vpop.f32.mrb[0].mxu0
    %v2867 = vadd.f32 %v2827, %v2866
    %v2868 = vpop.f32.mrb[0].mxu0
    %v2869 = vpop.f32.mrb[0].mxu0
    %v2870 = vpop.f32.mrb[0].mxu0
    %2871 = vdwg.mxu0
    %2872 = vmatprep.subr.bf16.mxu0 0
    %2873 = vmatpush1.bf16.msra.mxu0 %v2024
    %2874 = vmatprep.subr.bf16.mxu0 0
    %2875 = vmatpush1.bf16.msra.mxu0 %v2025
    %2876 = vmatprep.subr.bf16.mxu0 0
    %2877 = vmatpush1.bf16.msra.mxu0 %v2026
    %2878 = vmatprep.subr.bf16.mxu0 0
    %2879 = vmatpush1.bf16.msra.mxu0 %v2027
    %2880 = vmatprep.subr.bf16.mxu0 0
    %2881 = vmatpush1.bf16.msra.mxu0 %v2028
    %2882 = vmatprep.subr.bf16.mxu0 0
    %2883 = vmatpush1.bf16.msra.mxu0 %v2029
    %2884 = vmatprep.subr.bf16.mxu0 0
    %2885 = vmatpush1.bf16.msra.mxu0 %v2030
    %2886 = vmatprep.subr.bf16.mxu0 0
    %2887 = vmatpush1.bf16.msra.mxu0 %v2031
    %2888 = vmatprep.subr.bf16.mxu0 0
    %2889 = vmatpush1.bf16.msra.mxu0 %v2032
    %2890 = vmatprep.subr.bf16.mxu0 0
    %2891 = vmatpush1.bf16.msra.mxu0 %v2033
    %2892 = vmatprep.subr.bf16.mxu0 0
    %2893 = vmatpush1.bf16.msra.mxu0 %v2034
    %2894 = vmatprep.subr.bf16.mxu0 0
    %2895 = vmatpush1.bf16.msra.mxu0 %v2035
    %2896 = vmatprep.subr.bf16.mxu0 0
    %2897 = vmatpush1.bf16.msra.mxu0 %v2036
    %2898 = vmatprep.subr.bf16.mxu0 0
    %2899 = vmatpush1.bf16.msra.mxu0 %v2037
    %2900 = vmatprep.subr.bf16.mxu0 0
    %2901 = vmatpush1.bf16.msra.mxu0 %v2038
    %2902 = vmatprep.subr.bf16.mxu0 0
    %2903 = vmatpush1.bf16.msra.mxu0 %v2039
    %2904 = vmatprep.mubr.bf16.mxu0 %v254
    %2905 = vmatmul.mubr.bf16.gmra.mrb[0].mxu0 %v253
    %v2906 = vpop.f32.mrb[0].mxu0
    %v2907 = vadd.f32 %v2867, %v2906
    %v2908 = vpop.f32.mrb[0].mxu0
    %v2909 = vpop.f32.mrb[0].mxu0
    %v2910 = vpop.f32.mrb[0].mxu0
    %2911 = vdwg.mxu0
    %2912 = vmatprep.subr.bf16.mxu0 0
    %2913 = vmatpush1.bf16.msra.mxu0 %v2040
    %2914 = vmatprep.subr.bf16.mxu0 0
    %2915 = vmatpush1.bf16.msra.mxu0 %v2041
    %2916 = vmatprep.subr.bf16.mxu0 0
    %2917 = vmatpush1.bf16.msra.mxu0 %v2042
    %2918 = vmatprep.subr.bf16.mxu0 0
    %2919 = vmatpush1.bf16.msra.mxu0 %v2043
    %2920 = vmatprep.subr.bf16.mxu0 0
    %2921 = vmatpush1.bf16.msra.mxu0 %v2044
    %2922 = vmatprep.subr.bf16.mxu0 0
    %2923 = vmatpush1.bf16.msra.mxu0 %v2045
    %2924 = vmatprep.subr.bf16.mxu0 0
    %2925 = vmatpush1.bf16.msra.mxu0 %v2046
    %2926 = vmatprep.subr.bf16.mxu0 0
    %2927 = vmatpush1.bf16.msra.mxu0 %v2047
    %2928 = vmatprep.subr.bf16.mxu0 0
    %2929 = vmatpush1.bf16.msra.mxu0 %v2048
    %2930 = vmatprep.subr.bf16.mxu0 0
    %2931 = vmatpush1.bf16.msra.mxu0 %v2049
    %2932 = vmatprep.subr.bf16.mxu0 0
    %2933 = vmatpush1.bf16.msra.mxu0 %v2050
    %2934 = vmatprep.subr.bf16.mxu0 0
    %2935 = vmatpush1.bf16.msra.mxu0 %v2051
    %2936 = vmatprep.subr.bf16.mxu0 0
    %2937 = vmatpush1.bf16.msra.mxu0 %v2052
    %2938 = vmatprep.subr.bf16.mxu0 0
    %2939 = vmatpush1.bf16.msra.mxu0 %v2053
    %2940 = vmatprep.subr.bf16.mxu0 0
    %2941 = vmatpush1.bf16.msra.mxu0 %v2054
    %2942 = vmatprep.subr.bf16.mxu0 0
    %2943 = vmatpush1.bf16.msra.mxu0 %v2055
    %2944 = vmatprep.mubr.bf16.mxu0 %v256
    %2945 = vmatmul.mubr.bf16.gmra.mrb[0].mxu0 %v255
    %v2946 = vpop.f32.mrb[0].mxu0
    %v2947 = vadd.f32 %v2907, %v2946
    %v2948 = vpop.f32.mrb[0].mxu0
    %v2949 = vpop.f32.mrb[0].mxu0
    %v2950 = vpop.f32.mrb[0].mxu0
    %2951 = vdwg.mxu0
    %v2952 = vmax.f32 %v2947, 0.0
    %2953 = vst [vmem:[%s3] sm:$0x3] %v2952
    // Predicated region
    $region22: #{classification_forward.1} parent=1 // pred_check
      _
    $region23: #{classification_forward.1} parent=1 // pred_check_branch
      %2955 = sbr.rel (0) target = $region25
    $region24: #{classification_forward.1} parent=1 // pred_region
      _
    $region25: #{classification_forward.1} parent=1 // pred_fallthru
      _
    // Predicated region
    $region26: #{classification_forward.1} parent=1 // pred_check
      _
    $region27: #{classification_forward.1} parent=1 // pred_check_branch
      %2957 = sbr.rel (0) target = $region29
    $region28: #{classification_forward.1} parent=1 // pred_region
      _
    $region29: #{classification_forward.1} parent=1 // pred_fallthru
      _
    %2958 = vsyncpa [#allocation3], 1
    %2959 = vsyncpa [#allocation5], 1

</llo_original>
